<compile_context>
chip_gen: v7x
topology: tpu7x:2x2x1
jax: 0.10.0
libtpu: 0.0.40
codegen_flags: <defaults>
</compile_context>

<pallas_src>
import functools
import math

import jax
import jax.numpy as jnp
from jax import lax
from jax.experimental import pallas as pl
from jax.experimental.pallas import tpu as pltpu
from jax.scipy.special import erf as _erf_exact  # reference only

_SQRT_HALF = 0.7071067811865476


def _erf_approx(z):
    """Abramowitz & Stegun 7.1.26 rational approximation of erf.

    |error| <= 1.5e-7 over all reals (odd-symmetric).  Built only from ops
    guaranteed to lower on the TPU VPU/EUP (abs, exp, mul, add, div, select),
    so the kernel does not depend on a Mosaic erf lowering.  Not bit-exact
    with torch's erf-GELU; well below the test tolerance.
    """
    p = 0.3275911
    a1, a2, a3, a4, a5 = (0.254829592, -0.284496736, 1.421413741,
                          -1.453152027, 1.061405429)
    sign = jnp.where(z < 0.0, -1.0, 1.0)
    za = jnp.abs(z)
    t = 1.0 / (1.0 + p * za)
    poly = ((((a5 * t + a4) * t + a3) * t + a2) * t + a1) * t
    return sign * (1.0 - poly * jnp.exp(-za * za))


def _gelu_exact(x):
    # torch.nn.GELU() default: x * Phi(x) with the exact (erf-based) CDF.
    return 0.5 * x * (1.0 + _erf_approx(x * _SQRT_HALF))


def _layer_norm_f32(v, g_ref, b_ref, eps):
    """One-pass LayerNorm over the last axis in f32 (independent XLU
    reductions); variance guarded >= 0 against cancellation."""
    mu = jnp.mean(v, axis=-1, keepdims=True)
    ms = jnp.mean(v * v, axis=-1, keepdims=True)
    var = jnp.maximum(ms - mu * mu, 0.0)
    vn = (v - mu) * lax.rsqrt(var + eps)
    return vn * g_ref[...].astype(jnp.float32) + b_ref[...].astype(jnp.float32)


def mlpproj_kernel(*refs, eps1, eps2, has_pos):
    """One grid step = one (batch, token-tile) block.

    refs (has_pos=False):
      x (1,TN,Din), ln1_g (1,Din), ln1_b (1,Din), w1 (Din,Din), b1 (1,Din),
      w2 (Din,Dout), b2 (1,Dout), ln2_g (1,Dout), ln2_b (1,Dout),
      out (1,TN,Dout)
    With has_pos=True a (1,TN,Din) positional-embedding tile follows x.
    """
    if has_pos:
        (x_ref, pos_ref, g1_ref, b1_ref, w1_ref, c1_ref,
         w2_ref, c2_ref, g2_ref, b2_ref, o_ref) = refs
    else:
        (x_ref, g1_ref, b1_ref, w1_ref, c1_ref,
         w2_ref, c2_ref, g2_ref, b2_ref, o_ref) = refs
        pos_ref = None

    f32 = jnp.float32
    x = x_ref[0].astype(f32)                                   # (TN, Din)
    if has_pos:
        x = x + pos_ref[0].astype(f32)

    # LayerNorm(in_dim) then Linear(in_dim, in_dim): the MXU consumes the
    # weight dtype directly (bf16 for real checkpoints, no f32 weight copy),
    # accumulating in f32.
    h = _layer_norm_f32(x, g1_ref, b1_ref, eps1)
    h = jnp.dot(h.astype(w1_ref.dtype), w1_ref[...],
                preferred_element_type=f32)
    h = _gelu_exact(h + c1_ref[...].astype(f32))

    # Linear(in_dim, out_dim) then LayerNorm(out_dim).
    y = jnp.dot(h.astype(w2_ref.dtype), w2_ref[...],
                preferred_element_type=f32)
    y = y + c2_ref[...].astype(f32)
    out = _layer_norm_f32(y, g2_ref, b2_ref, eps2)

    o_ref[0] = out.astype(o_ref.dtype)


def _round_up(v, m):
    return ((v + m - 1) // m) * m


def _pick_token_tile(n_tokens, batch, token_tile):
    """Balanced token tile: pad at most 7 rows (vs. up to ~2x waste with a
    fixed tile), and produce >= 2 grid steps when possible so both v7x
    TensorCores get work."""
    token_tile = max(8, int(token_tile))
    n_tiles = max(1, pl.cdiv(n_tokens, token_tile))
    if batch * n_tiles < 2:
        n_tiles = min(2, pl.cdiv(n_tokens, 8))
    tn = _round_up(pl.cdiv(n_tokens, n_tiles), 8)
    return max(8, min(tn, _round_up(n_tokens, 8)))


def _build_call(B, N, Din, Dout, TN, out_dtype, eps1, eps2, has_pos,
                vmem_limit_bytes, single_buffer_weights):
    const2 = lambda b, n: (0, 0)

    # Resident weight slabs: constant index map, DMA'd once.  Single-buffer
    # them (pl.Buffered(1)) so they are not duplicated in VMEM.
    if single_buffer_weights:
        w1_spec = pl.BlockSpec((Din, Din), const2, pipeline_mode=pl.Buffered(1))
        w2_spec = pl.BlockSpec((Din, Dout), const2, pipeline_mode=pl.Buffered(1))
    else:
        w1_spec = pl.BlockSpec((Din, Din), const2)
        w2_spec = pl.BlockSpec((Din, Dout), const2)

    in_specs = [pl.BlockSpec((1, TN, Din), lambda b, n: (b, n, 0))]   # x tile
    if has_pos:
        # emb_pos tile: constant batch index, tiled along tokens (fused add).
        in_specs.append(pl.BlockSpec((1, TN, Din), lambda b, n: (0, n, 0)))
    in_specs += [
        pl.BlockSpec((1, Din), const2),     # LN1 gamma
        pl.BlockSpec((1, Din), const2),     # LN1 beta
        w1_spec,                            # W1 (resident)
        pl.BlockSpec((1, Din), const2),     # b1
        w2_spec,                            # W2 (resident)
        pl.BlockSpec((1, Dout), const2),    # b2
        pl.BlockSpec((1, Dout), const2),    # LN2 gamma
        pl.BlockSpec((1, Dout), const2),    # LN2 beta
    ]

    return pl.pallas_call(
        functools.partial(mlpproj_kernel, eps1=eps1, eps2=eps2,
                          has_pos=has_pos),
        out_shape=jax.ShapeDtypeStruct((B, N, Dout), out_dtype),
        grid_spec=pltpu.PrefetchScalarGridSpec(
            num_scalar_prefetch=0,
            # Ragged grid: no wrapper-side pad/slice; boundary output stores
            # are masked and garbage boundary rows never mix into valid rows.
            grid=(B, pl.cdiv(N, TN)),
            in_specs=in_specs,
            out_specs=pl.BlockSpec((1, TN, Dout), lambda b, n: (b, n, 0)),
        ),
        compiler_params=pltpu.CompilerParams(
            dimension_semantics=("parallel", "parallel"),
            vmem_limit_bytes=vmem_limit_bytes),
    )


def mlp_proj_forward(image_embeds, ln1_g, ln1_b, w1, c1, w2, c2, ln2_g, ln2_b,
                     *, emb_pos=None, eps1=1e-5, eps2=1e-5,
                     token_tile=256, out_dtype=None,
                     vmem_limit_bytes=48 * 1024 * 1024):
    """image_embeds: (B, N, Din); w1: (Din, Din) = torch_w1.T;
    w2: (Din, Dout) = torch_w2.T; LN params / biases as (1, Din) / (1, Dout).

    For best throughput pass bf16 image_embeds / weights (LN math stays f32
    in-kernel and the MXU accumulates in f32).  The 48 MiB VMEM default and
    token_tile=256 are sized for v7x (64 MiB VMEM, 2 TensorCores); on v5e/v6e
    larger token tiles (1024-2048) and ~96 MiB vmem_limit_bytes are fine.
    """
    x = image_embeds
    if emb_pos is not None:
        bs, n, d = x.shape
        x = x.reshape(-1, 2 * n, d)    # free view; the add itself is fused
        assert emb_pos.shape[-2:] == (x.shape[1], d), emb_pos.shape

    B, N, Din = x.shape
    Dout = w2.shape[1]
    out_dtype = x.dtype if out_dtype is None else out_dtype
    TN = _pick_token_tile(N, B, token_tile)

    operands = [x]
    if emb_pos is not None:
        operands.append(emb_pos)
    operands += [ln1_g, ln1_b, w1, c1, w2, c2, ln2_g, ln2_b]

    build = functools.partial(
        _build_call, B, N, Din, Dout, TN, out_dtype, eps1, eps2,
        emb_pos is not None, vmem_limit_bytes)
    try:
        return build(single_buffer_weights=True)(*operands)
    except Exception:
        # pl.Buffered(1) not accepted by this jax version: fall back to the
        # default double-buffered resident weights (costs VMEM, not speed or
        # correctness).
        return build(single_buffer_weights=False)(*operands)


def mlp_proj_reference(x, ln1_g, ln1_b, w1, c1, w2, c2, ln2_g, ln2_b,
                       *, emb_pos=None, eps1=1e-5, eps2=1e-5):
    """Pure-JAX reference matching the PyTorch forward (exact erf GELU) while
    emulating the kernel's MXU numerics: matmul operands rounded to the weight
    dtype, f32 accumulation."""
    f32 = jnp.float32
    hp = lax.Precision.HIGHEST

    def ln(v, g, b, eps):
        mu = v.mean(-1, keepdims=True)
        var = ((v - mu) ** 2).mean(-1, keepdims=True)
        return (v - mu) / jnp.sqrt(var + eps) * g.astype(f32) + b.astype(f32)

    xf = x.astype(f32)
    if emb_pos is not None:
        bs, n, d = xf.shape
        xf = xf.reshape(-1, 2 * n, d) + emb_pos.astype(f32)

    h = ln(xf, ln1_g, ln1_b, eps1)
    h = jnp.dot(h.astype(w1.dtype).astype(f32), w1.astype(f32), precision=hp)
    h = h + c1.astype(f32)
    h = 0.5 * h * (1.0 + _erf_exact(h * _SQRT_HALF))
    y = jnp.dot(h.astype(w2.dtype).astype(f32), w2.astype(f32), precision=hp)
    y = y + c2.astype(f32)
    return ln(y, ln2_g, ln2_b, eps2)


if __name__ == "__main__":
    # Small shapes consistent with the module (real Wan: Din=1280, N=257/514).
    # N=18 is deliberately not a multiple of 8 to exercise the masked ragged
    # boundary tile.
    B, N = 2, 18
    in_dim, out_dim = 256, 128

    key = jax.random.PRNGKey(0)
    ks = jax.random.split(key, 10)

    x = jax.random.normal(ks[0], (B, N, in_dim), dtype=jnp.float32)

    ln1_g = 1.0 + 0.1 * jax.random.normal(ks[1], (1, in_dim), dtype=jnp.float32)
    ln1_b = 0.1 * jax.random.normal(ks[2], (1, in_dim), dtype=jnp.float32)

    bound = 1.0 / math.sqrt(in_dim)
    # bf16 weights/biases: the dtype the kernel is meant to stream at real
    # shapes (native bf16 MXU operands, f32 accumulate).
    w1 = jax.random.uniform(ks[3], (in_dim, in_dim), minval=-bound,
                            maxval=bound, dtype=jnp.float32).astype(jnp.bfloat16)
    c1 = jax.random.uniform(ks[4], (1, in_dim), minval=-bound,
                            maxval=bound, dtype=jnp.float32).astype(jnp.bfloat16)
    w2 = jax.random.uniform(ks[5], (in_dim, out_dim), minval=-bound,
                            maxval=bound, dtype=jnp.float32).astype(jnp.bfloat16)
    c2 = jax.random.uniform(ks[6], (1, out_dim), minval=-bound,
                            maxval=bound, dtype=jnp.float32).astype(jnp.bfloat16)

    ln2_g = 1.0 + 0.1 * jax.random.normal(ks[7], (1, out_dim), dtype=jnp.float32)
    ln2_b = 0.1 * jax.random.normal(ks[8], (1, out_dim), dtype=jnp.float32)

    params = (ln1_g, ln1_b, w1, c1, w2, c2, ln2_g, ln2_b)

    # token_tile=8 so the small test exercises the (B, token-tiles) grid and
    # the masked boundary tile.
    out = mlp_proj_forward(x, *params, token_tile=8)
    out = jax.block_until_ready(out)
    ref = mlp_proj_reference(x, *params)
    assert out.shape == (B, N, out_dim), out.shape
    err = float(jnp.max(jnp.abs(out - ref)))
    assert jnp.allclose(out, ref, atol=5e-3, rtol=5e-3), f"mismatch: {err}"

    # flf_pos_emb path: (B, N, D) -> (B//2, 2N, D) view + emb_pos fused add.
    x2 = jax.random.normal(ks[9], (2, 9, in_dim), dtype=jnp.float32)
    emb_pos = 0.05 * jax.random.normal(jax.random.PRNGKey(1),
                                       (1, 18, in_dim), dtype=jnp.float32)
    out2 = mlp_proj_forward(x2, *params, emb_pos=emb_pos, token_tile=8)
    out2 = jax.block_until_ready(out2)
    ref2 = mlp_proj_reference(x2, *params, emb_pos=emb_pos)
    assert out2.shape == (1, 18, out_dim), out2.shape
    err2 = float(jnp.max(jnp.abs(out2 - ref2)))
    assert jnp.allclose(out2, ref2, atol=5e-3, rtol=5e-3), f"mismatch: {err2}"

    print("KERNEL_OK")
</pallas_src>

<mosaic_0001>
module attributes {stable_mosaic.version = 11 : i64} {
  func.func @mlpproj_kernel(%arg0: i32, %arg1: i32, %arg2: memref<1x8x256xf32, #tpu.memory_space<vmem>>, %arg3: memref<1x256xf32, #tpu.memory_space<vmem>>, %arg4: memref<1x256xf32, #tpu.memory_space<vmem>>, %arg5: memref<256x256xbf16, #tpu.memory_space<vmem>>, %arg6: memref<1x256xbf16, #tpu.memory_space<vmem>>, %arg7: memref<256x128xbf16, #tpu.memory_space<vmem>>, %arg8: memref<1x128xbf16, #tpu.memory_space<vmem>>, %arg9: memref<1x128xf32, #tpu.memory_space<vmem>>, %arg10: memref<1x128xf32, #tpu.memory_space<vmem>>, %arg11: memref<1x8x128xf32, #tpu.memory_space<vmem>>) attributes {dimension_semantics = [#tpu.dimension_semantics<parallel>, #tpu.dimension_semantics<parallel>], iteration_bounds = array<i64: 2, 3>, scalar_prefetch = 0 : i64, scratch_operands = 0 : i64, tpu.core_type = #tpu.core_type<tc>, window_params = [{transform_indices = @transform_0, window_bounds = array<i64: 1, 8, 256>}, {pipeline_mode = #tpu.pipeline_mode<synchronous>, transform_indices = @transform_1, window_bounds = array<i64: 1, 256>}, {pipeline_mode = #tpu.pipeline_mode<synchronous>, transform_indices = @transform_2, window_bounds = array<i64: 1, 256>}, {pipeline_mode = #tpu.pipeline_mode<synchronous>, transform_indices = @transform_3, window_bounds = array<i64: 256, 256>}, {pipeline_mode = #tpu.pipeline_mode<synchronous>, transform_indices = @transform_4, window_bounds = array<i64: 1, 256>}, {pipeline_mode = #tpu.pipeline_mode<synchronous>, transform_indices = @transform_5, window_bounds = array<i64: 256, 128>}, {pipeline_mode = #tpu.pipeline_mode<synchronous>, transform_indices = @transform_6, window_bounds = array<i64: 1, 128>}, {pipeline_mode = #tpu.pipeline_mode<synchronous>, transform_indices = @transform_7, window_bounds = array<i64: 1, 128>}, {pipeline_mode = #tpu.pipeline_mode<synchronous>, transform_indices = @transform_8, window_bounds = array<i64: 1, 128>}, {transform_indices = @transform_9, window_bounds = array<i64: 1, 8, 128>}]} {
    %c0 = arith.constant 0 : index
    %c0_0 = arith.constant 0 : index
    %c0_1 = arith.constant 0 : index
    %0 = vector.load %arg2[%c0, %c0_0, %c0_1] : memref<1x8x256xf32, #tpu.memory_space<vmem>>, vector<1x8x256xf32>
    %1 = vector.shape_cast %0 : vector<1x8x256xf32> to vector<8x256xf32>
    %cst = arith.constant dense<0.000000e+00> : vector<8xf32>
    %2 = vector.multi_reduction <add>, %1, %cst [1] : vector<8x256xf32> to vector<8xf32>
    %3 = vector.shape_cast %2 : vector<8xf32> to vector<8x1xf32>
    %cst_2 = arith.constant 2.560000e+02 : f32
    %4 = vector.broadcast %cst_2 : f32 to vector<8x1xf32>
    %5 = arith.divf %3, %4 : vector<8x1xf32>
    %6 = arith.mulf %1, %1 : vector<8x256xf32>
    %cst_3 = arith.constant dense<0.000000e+00> : vector<8xf32>
    %7 = vector.multi_reduction <add>, %6, %cst_3 [1] : vector<8x256xf32> to vector<8xf32>
    %8 = vector.shape_cast %7 : vector<8xf32> to vector<8x1xf32>
    %cst_4 = arith.constant 2.560000e+02 : f32
    %9 = vector.broadcast %cst_4 : f32 to vector<8x1xf32>
    %10 = arith.divf %8, %9 : vector<8x1xf32>
    %11 = arith.mulf %5, %5 : vector<8x1xf32>
    %12 = arith.subf %10, %11 : vector<8x1xf32>
    %cst_5 = arith.constant 0.000000e+00 : f32
    %13 = vector.broadcast %cst_5 : f32 to vector<8x1xf32>
    %14 = arith.maximumf %12, %13 : vector<8x1xf32>
    %15 = vector.broadcast %5 : vector<8x1xf32> to vector<8x256xf32>
    %16 = arith.subf %1, %15 : vector<8x256xf32>
    %cst_6 = arith.constant 9.99999974E-6 : f32
    %17 = vector.broadcast %cst_6 : f32 to vector<8x1xf32>
    %18 = arith.addf %14, %17 : vector<8x1xf32>
    %19 = math.rsqrt %18 : vector<8x1xf32>
    %20 = vector.broadcast %19 : vector<8x1xf32> to vector<8x256xf32>
    %21 = arith.mulf %16, %20 : vector<8x256xf32>
    %c0_7 = arith.constant 0 : index
    %c0_8 = arith.constant 0 : index
    %22 = vector.load %arg3[%c0_7, %c0_8] : memref<1x256xf32, #tpu.memory_space<vmem>>, vector<1x256xf32>
    %23 = vector.broadcast %22 : vector<1x256xf32> to vector<8x256xf32>
    %24 = arith.mulf %21, %23 : vector<8x256xf32>
    %c0_9 = arith.constant 0 : index
    %c0_10 = arith.constant 0 : index
    %25 = vector.load %arg4[%c0_9, %c0_10] : memref<1x256xf32, #tpu.memory_space<vmem>>, vector<1x256xf32>
    %26 = vector.broadcast %25 : vector<1x256xf32> to vector<8x256xf32>
    %27 = arith.addf %24, %26 : vector<8x256xf32>
    %28 = arith.truncf %27 : vector<8x256xf32> to vector<8x256xbf16>
    %c0_11 = arith.constant 0 : index
    %c0_12 = arith.constant 0 : index
    %29 = vector.load %arg5[%c0_11, %c0_12] : memref<256x256xbf16, #tpu.memory_space<vmem>>, vector<256x256xbf16>
    %cst_13 = arith.constant dense<0.000000e+00> : vector<8x256xf32>
    %30 = tpu.matmul %28, %29, %cst_13 {dimension_numbers = #tpu.dot_dimension_numbers<[1], [0], [0], [1], [0, 0, 1, 1], [], []>} : vector<8x256xbf16>, vector<256x256xbf16>, vector<8x256xf32> -> vector<8x256xf32>
    %c0_14 = arith.constant 0 : index
    %c0_15 = arith.constant 0 : index
    %31 = vector.load %arg6[%c0_14, %c0_15] : memref<1x256xbf16, #tpu.memory_space<vmem>>, vector<1x256xbf16>
    %32 = arith.extf %31 : vector<1x256xbf16> to vector<1x256xf32>
    %33 = vector.broadcast %32 : vector<1x256xf32> to vector<8x256xf32>
    %34 = arith.addf %30, %33 : vector<8x256xf32>
    %cst_16 = arith.constant 5.000000e-01 : f32
    %35 = vector.broadcast %cst_16 : f32 to vector<8x256xf32>
    %36 = arith.mulf %35, %34 : vector<8x256xf32>
    %cst_17 = arith.constant 0.707106769 : f32
    %37 = vector.broadcast %cst_17 : f32 to vector<8x256xf32>
    %38 = arith.mulf %34, %37 : vector<8x256xf32>
    %cst_18 = arith.constant 0.000000e+00 : f32
    %39 = vector.broadcast %cst_18 : f32 to vector<8x256xf32>
    %40 = arith.cmpf olt, %38, %39 : vector<8x256xf32>
    %cst_19 = arith.constant -1.000000e+00 : f32
    %cst_20 = arith.constant 1.000000e+00 : f32
    %41 = vector.broadcast %cst_19 : f32 to vector<8x256xf32>
    %42 = vector.broadcast %cst_20 : f32 to vector<8x256xf32>
    %43 = arith.select %40, %41, %42 : vector<8x256xi1>, vector<8x256xf32>
    %44 = math.absf %38 : vector<8x256xf32>
    %cst_21 = arith.constant 0.327591091 : f32
    %45 = vector.broadcast %cst_21 : f32 to vector<8x256xf32>
    %46 = arith.mulf %45, %44 : vector<8x256xf32>
    %cst_22 = arith.constant 1.000000e+00 : f32
    %47 = vector.broadcast %cst_22 : f32 to vector<8x256xf32>
    %48 = arith.addf %47, %46 : vector<8x256xf32>
    %cst_23 = arith.constant 1.000000e+00 : f32
    %49 = vector.broadcast %cst_23 : f32 to vector<8x256xf32>
    %50 = arith.divf %49, %48 : vector<8x256xf32>
    %cst_24 = arith.constant 1.06140542 : f32
    %51 = vector.broadcast %cst_24 : f32 to vector<8x256xf32>
    %52 = arith.mulf %51, %50 : vector<8x256xf32>
    %cst_25 = arith.constant -1.45315206 : f32
    %53 = vector.broadcast %cst_25 : f32 to vector<8x256xf32>
    %54 = arith.addf %52, %53 : vector<8x256xf32>
    %55 = arith.mulf %54, %50 : vector<8x256xf32>
    %cst_26 = arith.constant 1.42141378 : f32
    %56 = vector.broadcast %cst_26 : f32 to vector<8x256xf32>
    %57 = arith.addf %55, %56 : vector<8x256xf32>
    %58 = arith.mulf %57, %50 : vector<8x256xf32>
    %cst_27 = arith.constant -0.284496725 : f32
    %59 = vector.broadcast %cst_27 : f32 to vector<8x256xf32>
    %60 = arith.addf %58, %59 : vector<8x256xf32>
    %61 = arith.mulf %60, %50 : vector<8x256xf32>
    %cst_28 = arith.constant 0.254829586 : f32
    %62 = vector.broadcast %cst_28 : f32 to vector<8x256xf32>
    %63 = arith.addf %61, %62 : vector<8x256xf32>
    %64 = arith.mulf %63, %50 : vector<8x256xf32>
    %cst_29 = arith.constant 0.000000e+00 : f32
    %65 = vector.broadcast %cst_29 : f32 to vector<8x256xf32>
    %66 = arith.subf %65, %44 : vector<8x256xf32>
    %67 = arith.mulf %66, %44 : vector<8x256xf32>
    %68 = math.exp %67 : vector<8x256xf32>
    %69 = arith.mulf %64, %68 : vector<8x256xf32>
    %cst_30 = arith.constant 1.000000e+00 : f32
    %70 = vector.broadcast %cst_30 : f32 to vector<8x256xf32>
    %71 = arith.subf %70, %69 : vector<8x256xf32>
    %72 = arith.mulf %43, %71 : vector<8x256xf32>
    %cst_31 = arith.constant 1.000000e+00 : f32
    %73 = vector.broadcast %cst_31 : f32 to vector<8x256xf32>
    %74 = arith.addf %73, %72 : vector<8x256xf32>
    %75 = arith.mulf %36, %74 : vector<8x256xf32>
    %76 = arith.truncf %75 : vector<8x256xf32> to vector<8x256xbf16>
    %c0_32 = arith.constant 0 : index
    %c0_33 = arith.constant 0 : index
    %77 = vector.load %arg7[%c0_32, %c0_33] : memref<256x128xbf16, #tpu.memory_space<vmem>>, vector<256x128xbf16>
    %cst_34 = arith.constant dense<0.000000e+00> : vector<8x128xf32>
    %78 = tpu.matmul %76, %77, %cst_34 {dimension_numbers = #tpu.dot_dimension_numbers<[1], [0], [0], [1], [0, 0, 1, 1], [], []>} : vector<8x256xbf16>, vector<256x128xbf16>, vector<8x128xf32> -> vector<8x128xf32>
    %c0_35 = arith.constant 0 : index
    %c0_36 = arith.constant 0 : index
    %79 = vector.load %arg8[%c0_35, %c0_36] : memref<1x128xbf16, #tpu.memory_space<vmem>>, vector<1x128xbf16>
    %80 = arith.extf %79 : vector<1x128xbf16> to vector<1x128xf32>
    %81 = vector.broadcast %80 : vector<1x128xf32> to vector<8x128xf32>
    %82 = arith.addf %78, %81 : vector<8x128xf32>
    %cst_37 = arith.constant dense<0.000000e+00> : vector<8xf32>
    %83 = vector.multi_reduction <add>, %82, %cst_37 [1] : vector<8x128xf32> to vector<8xf32>
    %84 = vector.shape_cast %83 : vector<8xf32> to vector<8x1xf32>
    %cst_38 = arith.constant 1.280000e+02 : f32
    %85 = vector.broadcast %cst_38 : f32 to vector<8x1xf32>
    %86 = arith.divf %84, %85 : vector<8x1xf32>
    %87 = arith.mulf %82, %82 : vector<8x128xf32>
    %cst_39 = arith.constant dense<0.000000e+00> : vector<8xf32>
    %88 = vector.multi_reduction <add>, %87, %cst_39 [1] : vector<8x128xf32> to vector<8xf32>
    %89 = vector.shape_cast %88 : vector<8xf32> to vector<8x1xf32>
    %cst_40 = arith.constant 1.280000e+02 : f32
    %90 = vector.broadcast %cst_40 : f32 to vector<8x1xf32>
    %91 = arith.divf %89, %90 : vector<8x1xf32>
    %92 = arith.mulf %86, %86 : vector<8x1xf32>
    %93 = arith.subf %91, %92 : vector<8x1xf32>
    %cst_41 = arith.constant 0.000000e+00 : f32
    %94 = vector.broadcast %cst_41 : f32 to vector<8x1xf32>
    %95 = arith.maximumf %93, %94 : vector<8x1xf32>
    %96 = vector.broadcast %86 : vector<8x1xf32> to vector<8x128xf32>
    %97 = arith.subf %82, %96 : vector<8x128xf32>
    %cst_42 = arith.constant 9.99999974E-6 : f32
    %98 = vector.broadcast %cst_42 : f32 to vector<8x1xf32>
    %99 = arith.addf %95, %98 : vector<8x1xf32>
    %100 = math.rsqrt %99 : vector<8x1xf32>
    %101 = vector.broadcast %100 : vector<8x1xf32> to vector<8x128xf32>
    %102 = arith.mulf %97, %101 : vector<8x128xf32>
    %c0_43 = arith.constant 0 : index
    %c0_44 = arith.constant 0 : index
    %103 = vector.load %arg9[%c0_43, %c0_44] : memref<1x128xf32, #tpu.memory_space<vmem>>, vector<1x128xf32>
    %104 = vector.broadcast %103 : vector<1x128xf32> to vector<8x128xf32>
    %105 = arith.mulf %102, %104 : vector<8x128xf32>
    %c0_45 = arith.constant 0 : index
    %c0_46 = arith.constant 0 : index
    %106 = vector.load %arg10[%c0_45, %c0_46] : memref<1x128xf32, #tpu.memory_space<vmem>>, vector<1x128xf32>
    %107 = vector.broadcast %106 : vector<1x128xf32> to vector<8x128xf32>
    %108 = arith.addf %105, %107 : vector<8x128xf32>
    %c0_47 = arith.constant 0 : index
    %c0_48 = arith.constant 0 : index
    %c0_49 = arith.constant 0 : index
    %109 = vector.load %arg11[%c0_47, %c0_48, %c0_49] : memref<1x8x128xf32, #tpu.memory_space<vmem>>, vector<1x8x128xf32>
    %110 = vector.shape_cast %109 : vector<1x8x128xf32> to vector<8x128xf32>
    %111 = vector.shape_cast %108 : vector<8x128xf32> to vector<1x8x128xf32>
    tpu.vector_store %arg11[%c0_47, %c0_48, %c0_49], %111 {strides = array<i32>} : memref<1x8x128xf32, #tpu.memory_space<vmem>>, vector<1x8x128xf32>,
    return
  }
  func.func @transform_0(%arg0: i32, %arg1: i32) -> (i32, i32, i32) {
    %c0_i32 = arith.constant 0 : i32
    %c0_i32_0 = arith.constant 0 : i32
    return %arg0, %arg1, %c0_i32 : i32, i32, i32
  }
  func.func @transform_1(%arg0: i32, %arg1: i32) -> (i32, i32) {
    %c0_i32 = arith.constant 0 : i32
    %c0_i32_0 = arith.constant 0 : i32
    %c0_i32_1 = arith.constant 0 : i32
    return %c0_i32, %c0_i32_0 : i32, i32
  }
  func.func @transform_2(%arg0: i32, %arg1: i32) -> (i32, i32) {
    %c0_i32 = arith.constant 0 : i32
    %c0_i32_0 = arith.constant 0 : i32
    %c0_i32_1 = arith.constant 0 : i32
    return %c0_i32, %c0_i32_0 : i32, i32
  }
  func.func @transform_3(%arg0: i32, %arg1: i32) -> (i32, i32) {
    %c0_i32 = arith.constant 0 : i32
    %c0_i32_0 = arith.constant 0 : i32
    %c0_i32_1 = arith.constant 0 : i32
    return %c0_i32, %c0_i32_0 : i32, i32
  }
  func.func @transform_4(%arg0: i32, %arg1: i32) -> (i32, i32) {
    %c0_i32 = arith.constant 0 : i32
    %c0_i32_0 = arith.constant 0 : i32
    %c0_i32_1 = arith.constant 0 : i32
    return %c0_i32, %c0_i32_0 : i32, i32
  }
  func.func @transform_5(%arg0: i32, %arg1: i32) -> (i32, i32) {
    %c0_i32 = arith.constant 0 : i32
    %c0_i32_0 = arith.constant 0 : i32
    %c0_i32_1 = arith.constant 0 : i32
    return %c0_i32, %c0_i32_0 : i32, i32
  }
  func.func @transform_6(%arg0: i32, %arg1: i32) -> (i32, i32) {
    %c0_i32 = arith.constant 0 : i32
    %c0_i32_0 = arith.constant 0 : i32
    %c0_i32_1 = arith.constant 0 : i32
    return %c0_i32, %c0_i32_0 : i32, i32
  }
  func.func @transform_7(%arg0: i32, %arg1: i32) -> (i32, i32) {
    %c0_i32 = arith.constant 0 : i32
    %c0_i32_0 = arith.constant 0 : i32
    %c0_i32_1 = arith.constant 0 : i32
    return %c0_i32, %c0_i32_0 : i32, i32
  }
  func.func @transform_8(%arg0: i32, %arg1: i32) -> (i32, i32) {
    %c0_i32 = arith.constant 0 : i32
    %c0_i32_0 = arith.constant 0 : i32
    %c0_i32_1 = arith.constant 0 : i32
    return %c0_i32, %c0_i32_0 : i32, i32
  }
  func.func @transform_9(%arg0: i32, %arg1: i32) -> (i32, i32, i32) {
    %c0_i32 = arith.constant 0 : i32
    %c0_i32_0 = arith.constant 0 : i32
    return %arg0, %arg1, %c0_i32 : i32, i32, i32
  }
}

module attributes {stable_mosaic.version = 11 : i64} {
  func.func @mlpproj_kernel(%arg0: i32, %arg1: i32, %arg2: memref<1x8x256xf32, #tpu.memory_space<vmem>>, %arg3: memref<1x256xf32, #tpu.memory_space<vmem>>, %arg4: memref<1x256xf32, #tpu.memory_space<vmem>>, %arg5: memref<256x256xbf16, #tpu.memory_space<vmem>>, %arg6: memref<1x256xbf16, #tpu.memory_space<vmem>>, %arg7: memref<256x128xbf16, #tpu.memory_space<vmem>>, %arg8: memref<1x128xbf16, #tpu.memory_space<vmem>>, %arg9: memref<1x128xf32, #tpu.memory_space<vmem>>, %arg10: memref<1x128xf32, #tpu.memory_space<vmem>>, %arg11: memref<1x8x128xf32, #tpu.memory_space<vmem>>) attributes {dimension_semantics = [#tpu.dimension_semantics<parallel>, #tpu.dimension_semantics<parallel>], iteration_bounds = array<i64: 2, 3>, scalar_prefetch = 0 : i64, scratch_operands = 0 : i64, tpu.core_type = #tpu.core_type<tc>, window_params = [{transform_indices = @transform_0, window_bounds = array<i64: 1, 8, 256>}, {pipeline_mode = #tpu.pipeline_mode<synchronous>, transform_indices = @transform_1, window_bounds = array<i64: 1, 256>}, {pipeline_mode = #tpu.pipeline_mode<synchronous>, transform_indices = @transform_2, window_bounds = array<i64: 1, 256>}, {pipeline_mode = #tpu.pipeline_mode<synchronous>, transform_indices = @transform_3, window_bounds = array<i64: 256, 256>}, {pipeline_mode = #tpu.pipeline_mode<synchronous>, transform_indices = @transform_4, window_bounds = array<i64: 1, 256>}, {pipeline_mode = #tpu.pipeline_mode<synchronous>, transform_indices = @transform_5, window_bounds = array<i64: 256, 128>}, {pipeline_mode = #tpu.pipeline_mode<synchronous>, transform_indices = @transform_6, window_bounds = array<i64: 1, 128>}, {pipeline_mode = #tpu.pipeline_mode<synchronous>, transform_indices = @transform_7, window_bounds = array<i64: 1, 128>}, {pipeline_mode = #tpu.pipeline_mode<synchronous>, transform_indices = @transform_8, window_bounds = array<i64: 1, 128>}, {transform_indices = @transform_9, window_bounds = array<i64: 1, 8, 128>}]} {
    %c0 = arith.constant 0 : index
    %c0_0 = arith.constant 0 : index
    %c0_1 = arith.constant 0 : index
    %0 = vector.load %arg2[%c0, %c0_0, %c0_1] : memref<1x8x256xf32, #tpu.memory_space<vmem>>, vector<1x8x256xf32>
    %1 = vector.shape_cast %0 : vector<1x8x256xf32> to vector<8x256xf32>
    %cst = arith.constant dense<0.000000e+00> : vector<8xf32>
    %2 = vector.multi_reduction <add>, %1, %cst [1] : vector<8x256xf32> to vector<8xf32>
    %3 = vector.shape_cast %2 : vector<8xf32> to vector<8x1xf32>
    %cst_2 = arith.constant 2.560000e+02 : f32
    %4 = vector.broadcast %cst_2 : f32 to vector<8x1xf32>
    %5 = arith.divf %3, %4 : vector<8x1xf32>
    %6 = arith.mulf %1, %1 : vector<8x256xf32>
    %cst_3 = arith.constant dense<0.000000e+00> : vector<8xf32>
    %7 = vector.multi_reduction <add>, %6, %cst_3 [1] : vector<8x256xf32> to vector<8xf32>
    %8 = vector.shape_cast %7 : vector<8xf32> to vector<8x1xf32>
    %cst_4 = arith.constant 2.560000e+02 : f32
    %9 = vector.broadcast %cst_4 : f32 to vector<8x1xf32>
    %10 = arith.divf %8, %9 : vector<8x1xf32>
    %11 = arith.mulf %5, %5 : vector<8x1xf32>
    %12 = arith.subf %10, %11 : vector<8x1xf32>
    %cst_5 = arith.constant 0.000000e+00 : f32
    %13 = vector.broadcast %cst_5 : f32 to vector<8x1xf32>
    %14 = arith.maximumf %12, %13 : vector<8x1xf32>
    %15 = vector.broadcast %5 : vector<8x1xf32> to vector<8x256xf32>
    %16 = arith.subf %1, %15 : vector<8x256xf32>
    %cst_6 = arith.constant 9.99999974E-6 : f32
    %17 = vector.broadcast %cst_6 : f32 to vector<8x1xf32>
    %18 = arith.addf %14, %17 : vector<8x1xf32>
    %19 = math.rsqrt %18 : vector<8x1xf32>
    %20 = vector.broadcast %19 : vector<8x1xf32> to vector<8x256xf32>
    %21 = arith.mulf %16, %20 : vector<8x256xf32>
    %c0_7 = arith.constant 0 : index
    %c0_8 = arith.constant 0 : index
    %22 = vector.load %arg3[%c0_7, %c0_8] : memref<1x256xf32, #tpu.memory_space<vmem>>, vector<1x256xf32>
    %23 = vector.broadcast %22 : vector<1x256xf32> to vector<8x256xf32>
    %24 = arith.mulf %21, %23 : vector<8x256xf32>
    %c0_9 = arith.constant 0 : index
    %c0_10 = arith.constant 0 : index
    %25 = vector.load %arg4[%c0_9, %c0_10] : memref<1x256xf32, #tpu.memory_space<vmem>>, vector<1x256xf32>
    %26 = vector.broadcast %25 : vector<1x256xf32> to vector<8x256xf32>
    %27 = arith.addf %24, %26 : vector<8x256xf32>
    %28 = arith.truncf %27 : vector<8x256xf32> to vector<8x256xbf16>
    %c0_11 = arith.constant 0 : index
    %c0_12 = arith.constant 0 : index
    %29 = vector.load %arg5[%c0_11, %c0_12] : memref<256x256xbf16, #tpu.memory_space<vmem>>, vector<256x256xbf16>
    %cst_13 = arith.constant dense<0.000000e+00> : vector<8x256xf32>
    %30 = tpu.matmul %28, %29, %cst_13 {dimension_numbers = #tpu.dot_dimension_numbers<[1], [0], [0], [1], [0, 0, 1, 1], [], []>} : vector<8x256xbf16>, vector<256x256xbf16>, vector<8x256xf32> -> vector<8x256xf32>
    %c0_14 = arith.constant 0 : index
    %c0_15 = arith.constant 0 : index
    %31 = vector.load %arg6[%c0_14, %c0_15] : memref<1x256xbf16, #tpu.memory_space<vmem>>, vector<1x256xbf16>
    %32 = arith.extf %31 : vector<1x256xbf16> to vector<1x256xf32>
    %33 = vector.broadcast %32 : vector<1x256xf32> to vector<8x256xf32>
    %34 = arith.addf %30, %33 : vector<8x256xf32>
    %cst_16 = arith.constant 5.000000e-01 : f32
    %35 = vector.broadcast %cst_16 : f32 to vector<8x256xf32>
    %36 = arith.mulf %35, %34 : vector<8x256xf32>
    %cst_17 = arith.constant 0.707106769 : f32
    %37 = vector.broadcast %cst_17 : f32 to vector<8x256xf32>
    %38 = arith.mulf %34, %37 : vector<8x256xf32>
    %cst_18 = arith.constant 0.000000e+00 : f32
    %39 = vector.broadcast %cst_18 : f32 to vector<8x256xf32>
    %40 = arith.cmpf olt, %38, %39 : vector<8x256xf32>
    %cst_19 = arith.constant -1.000000e+00 : f32
    %cst_20 = arith.constant 1.000000e+00 : f32
    %41 = vector.broadcast %cst_19 : f32 to vector<8x256xf32>
    %42 = vector.broadcast %cst_20 : f32 to vector<8x256xf32>
    %43 = arith.select %40, %41, %42 : vector<8x256xi1>, vector<8x256xf32>
    %44 = math.absf %38 : vector<8x256xf32>
    %cst_21 = arith.constant 0.327591091 : f32
    %45 = vector.broadcast %cst_21 : f32 to vector<8x256xf32>
    %46 = arith.mulf %45, %44 : vector<8x256xf32>
    %cst_22 = arith.constant 1.000000e+00 : f32
    %47 = vector.broadcast %cst_22 : f32 to vector<8x256xf32>
    %48 = arith.addf %47, %46 : vector<8x256xf32>
    %cst_23 = arith.constant 1.000000e+00 : f32
    %49 = vector.broadcast %cst_23 : f32 to vector<8x256xf32>
    %50 = arith.divf %49, %48 : vector<8x256xf32>
    %cst_24 = arith.constant 1.06140542 : f32
    %51 = vector.broadcast %cst_24 : f32 to vector<8x256xf32>
    %52 = arith.mulf %51, %50 : vector<8x256xf32>
    %cst_25 = arith.constant -1.45315206 : f32
    %53 = vector.broadcast %cst_25 : f32 to vector<8x256xf32>
    %54 = arith.addf %52, %53 : vector<8x256xf32>
    %55 = arith.mulf %54, %50 : vector<8x256xf32>
    %cst_26 = arith.constant 1.42141378 : f32
    %56 = vector.broadcast %cst_26 : f32 to vector<8x256xf32>
    %57 = arith.addf %55, %56 : vector<8x256xf32>
    %58 = arith.mulf %57, %50 : vector<8x256xf32>
    %cst_27 = arith.constant -0.284496725 : f32
    %59 = vector.broadcast %cst_27 : f32 to vector<8x256xf32>
    %60 = arith.addf %58, %59 : vector<8x256xf32>
    %61 = arith.mulf %60, %50 : vector<8x256xf32>
    %cst_28 = arith.constant 0.254829586 : f32
    %62 = vector.broadcast %cst_28 : f32 to vector<8x256xf32>
    %63 = arith.addf %61, %62 : vector<8x256xf32>
    %64 = arith.mulf %63, %50 : vector<8x256xf32>
    %cst_29 = arith.constant 0.000000e+00 : f32
    %65 = vector.broadcast %cst_29 : f32 to vector<8x256xf32>
    %66 = arith.subf %65, %44 : vector<8x256xf32>
    %67 = arith.mulf %66, %44 : vector<8x256xf32>
    %68 = math.exp %67 : vector<8x256xf32>
    %69 = arith.mulf %64, %68 : vector<8x256xf32>
    %cst_30 = arith.constant 1.000000e+00 : f32
    %70 = vector.broadcast %cst_30 : f32 to vector<8x256xf32>
    %71 = arith.subf %70, %69 : vector<8x256xf32>
    %72 = arith.mulf %43, %71 : vector<8x256xf32>
    %cst_31 = arith.constant 1.000000e+00 : f32
    %73 = vector.broadcast %cst_31 : f32 to vector<8x256xf32>
    %74 = arith.addf %73, %72 : vector<8x256xf32>
    %75 = arith.mulf %36, %74 : vector<8x256xf32>
    %76 = arith.truncf %75 : vector<8x256xf32> to vector<8x256xbf16>
    %c0_32 = arith.constant 0 : index
    %c0_33 = arith.constant 0 : index
    %77 = vector.load %arg7[%c0_32, %c0_33] : memref<256x128xbf16, #tpu.memory_space<vmem>>, vector<256x128xbf16>
    %cst_34 = arith.constant dense<0.000000e+00> : vector<8x128xf32>
    %78 = tpu.matmul %76, %77, %cst_34 {dimension_numbers = #tpu.dot_dimension_numbers<[1], [0], [0], [1], [0, 0, 1, 1], [], []>} : vector<8x256xbf16>, vector<256x128xbf16>, vector<8x128xf32> -> vector<8x128xf32>
    %c0_35 = arith.constant 0 : index
    %c0_36 = arith.constant 0 : index
    %79 = vector.load %arg8[%c0_35, %c0_36] : memref<1x128xbf16, #tpu.memory_space<vmem>>, vector<1x128xbf16>
    %80 = arith.extf %79 : vector<1x128xbf16> to vector<1x128xf32>
    %81 = vector.broadcast %80 : vector<1x128xf32> to vector<8x128xf32>
    %82 = arith.addf %78, %81 : vector<8x128xf32>
    %cst_37 = arith.constant dense<0.000000e+00> : vector<8xf32>
    %83 = vector.multi_reduction <add>, %82, %cst_37 [1] : vector<8x128xf32> to vector<8xf32>
    %84 = vector.shape_cast %83 : vector<8xf32> to vector<8x1xf32>
    %cst_38 = arith.constant 1.280000e+02 : f32
    %85 = vector.broadcast %cst_38 : f32 to vector<8x1xf32>
    %86 = arith.divf %84, %85 : vector<8x1xf32>
    %87 = arith.mulf %82, %82 : vector<8x128xf32>
    %cst_39 = arith.constant dense<0.000000e+00> : vector<8xf32>
    %88 = vector.multi_reduction <add>, %87, %cst_39 [1] : vector<8x128xf32> to vector<8xf32>
    %89 = vector.shape_cast %88 : vector<8xf32> to vector<8x1xf32>
    %cst_40 = arith.constant 1.280000e+02 : f32
    %90 = vector.broadcast %cst_40 : f32 to vector<8x1xf32>
    %91 = arith.divf %89, %90 : vector<8x1xf32>
    %92 = arith.mulf %86, %86 : vector<8x1xf32>
    %93 = arith.subf %91, %92 : vector<8x1xf32>
    %cst_41 = arith.constant 0.000000e+00 : f32
    %94 = vector.broadcast %cst_41 : f32 to vector<8x1xf32>
    %95 = arith.maximumf %93, %94 : vector<8x1xf32>
    %96 = vector.broadcast %86 : vector<8x1xf32> to vector<8x128xf32>
    %97 = arith.subf %82, %96 : vector<8x128xf32>
    %cst_42 = arith.constant 9.99999974E-6 : f32
    %98 = vector.broadcast %cst_42 : f32 to vector<8x1xf32>
    %99 = arith.addf %95, %98 : vector<8x1xf32>
    %100 = math.rsqrt %99 : vector<8x1xf32>
    %101 = vector.broadcast %100 : vector<8x1xf32> to vector<8x128xf32>
    %102 = arith.mulf %97, %101 : vector<8x128xf32>
    %c0_43 = arith.constant 0 : index
    %c0_44 = arith.constant 0 : index
    %103 = vector.load %arg9[%c0_43, %c0_44] : memref<1x128xf32, #tpu.memory_space<vmem>>, vector<1x128xf32>
    %104 = vector.broadcast %103 : vector<1x128xf32> to vector<8x128xf32>
    %105 = arith.mulf %102, %104 : vector<8x128xf32>
    %c0_45 = arith.constant 0 : index
    %c0_46 = arith.constant 0 : index
    %106 = vector.load %arg10[%c0_45, %c0_46] : memref<1x128xf32, #tpu.memory_space<vmem>>, vector<1x128xf32>
    %107 = vector.broadcast %106 : vector<1x128xf32> to vector<8x128xf32>
    %108 = arith.addf %105, %107 : vector<8x128xf32>
    %c0_47 = arith.constant 0 : index
    %c0_48 = arith.constant 0 : index
    %c0_49 = arith.constant 0 : index
    %109 = vector.load %arg11[%c0_47, %c0_48, %c0_49] : memref<1x8x128xf32, #tpu.memory_space<vmem>>, vector<1x8x128xf32>
    %110 = vector.shape_cast %109 : vector<1x8x128xf32> to vector<8x128xf32>
    %111 = vector.shape_cast %108 : vector<8x128xf32> to vector<1x8x128xf32>
    tpu.vector_store %arg11[%c0_47, %c0_48, %c0_49], %111 {strides = array<i32>} : memref<1x8x128xf32, #tpu.memory_space<vmem>>, vector<1x8x128xf32>,
    return
  }
  func.func @transform_0(%arg0: i32, %arg1: i32) -> (i32, i32, i32) {
    %c0_i32 = arith.constant 0 : i32
    %c0_i32_0 = arith.constant 0 : i32
    return %arg0, %arg1, %c0_i32 : i32, i32, i32
  }
  func.func @transform_1(%arg0: i32, %arg1: i32) -> (i32, i32) {
    %c0_i32 = arith.constant 0 : i32
    %c0_i32_0 = arith.constant 0 : i32
    %c0_i32_1 = arith.constant 0 : i32
    return %c0_i32, %c0_i32_0 : i32, i32
  }
  func.func @transform_2(%arg0: i32, %arg1: i32) -> (i32, i32) {
    %c0_i32 = arith.constant 0 : i32
    %c0_i32_0 = arith.constant 0 : i32
    %c0_i32_1 = arith.constant 0 : i32
    return %c0_i32, %c0_i32_0 : i32, i32
  }
  func.func @transform_3(%arg0: i32, %arg1: i32) -> (i32, i32) {
    %c0_i32 = arith.constant 0 : i32
    %c0_i32_0 = arith.constant 0 : i32
    %c0_i32_1 = arith.constant 0 : i32
    return %c0_i32, %c0_i32_0 : i32, i32
  }
  func.func @transform_4(%arg0: i32, %arg1: i32) -> (i32, i32) {
    %c0_i32 = arith.constant 0 : i32
    %c0_i32_0 = arith.constant 0 : i32
    %c0_i32_1 = arith.constant 0 : i32
    return %c0_i32, %c0_i32_0 : i32, i32
  }
  func.func @transform_5(%arg0: i32, %arg1: i32) -> (i32, i32) {
    %c0_i32 = arith.constant 0 : i32
    %c0_i32_0 = arith.constant 0 : i32
    %c0_i32_1 = arith.constant 0 : i32
    return %c0_i32, %c0_i32_0 : i32, i32
  }
  func.func @transform_6(%arg0: i32, %arg1: i32) -> (i32, i32) {
    %c0_i32 = arith.constant 0 : i32
    %c0_i32_0 = arith.constant 0 : i32
    %c0_i32_1 = arith.constant 0 : i32
    return %c0_i32, %c0_i32_0 : i32, i32
  }
  func.func @transform_7(%arg0: i32, %arg1: i32) -> (i32, i32) {
    %c0_i32 = arith.constant 0 : i32
    %c0_i32_0 = arith.constant 0 : i32
    %c0_i32_1 = arith.constant 0 : i32
    return %c0_i32, %c0_i32_0 : i32, i32
  }
  func.func @transform_8(%arg0: i32, %arg1: i32) -> (i32, i32) {
    %c0_i32 = arith.constant 0 : i32
    %c0_i32_0 = arith.constant 0 : i32
    %c0_i32_1 = arith.constant 0 : i32
    return %c0_i32, %c0_i32_0 : i32, i32
  }
  func.func @transform_9(%arg0: i32, %arg1: i32) -> (i32, i32, i32) {
    %c0_i32 = arith.constant 0 : i32
    %c0_i32_0 = arith.constant 0 : i32
    return %arg0, %arg1, %c0_i32 : i32, i32, i32
  }
}

</mosaic_0001>

<llo_original>
// kernel: tpu_custom_call.1
$region0: #{tpu_custom_call.1}
  #allocation0 [shape = 'u32[]', space=smem, size = 0x4, offset = 0x4, fixed_abs, tag = 'smem constant byte address 0x4 - core index']
  #allocation1 [shape = 'u32[144,128]{1,0:T(1,128)}', space=vmem, size = 0x12000, scoped, tag = 'internal scratch']
  %s0 = inlined_call_operand.vmem [shape: f32[2,18,256], index: 0, kind: input, shape index: {}]
  %s1 = inlined_call_operand.vmem [shape: f32[1,256], index: 1, kind: input, shape index: {}]
  %s2 = inlined_call_operand.vmem [shape: f32[1,256], index: 2, kind: input, shape index: {}]
  %s3 = inlined_call_operand.hbm [shape: bf16[256,256], index: 3, kind: input, shape index: {}]
  %s4 = inlined_call_operand.vmem [shape: bf16[1,256], index: 4, kind: input, shape index: {}]
  %s5 = inlined_call_operand.vmem [shape: bf16[256,128], index: 5, kind: input, shape index: {}]
  %s6 = inlined_call_operand.vmem [shape: bf16[1,128], index: 6, kind: input, shape index: {}]
  %s7 = inlined_call_operand.vmem [shape: f32[1,128], index: 7, kind: input, shape index: {}]
  %s8 = inlined_call_operand.vmem [shape: f32[1,128], index: 8, kind: input, shape index: {}]
  %s9 = inlined_call_operand.vmem [shape: f32[2,18,128], index: 9, kind: output, shape index: {}]
  %s10 = sld [smem:[#allocation0]]
  $region73: #{tpu_custom_call.1} parent=0
    _
  %s12 = ssub.s32 1, %s10
  %s13 = scalar_select 0, %s12, %s10
  $region1: #{tpu_custom_call.1} parent=0
    #allocation2 [shape = 'u8[131072]{0}', space=vmem, size = 0x20000, scoped, tag = 'input window, operand 3, single buffered']
    #allocation3 [shape = 's32[2]{0}', space=sflag, size = 0x8, scoped, tag = 'scoped memory for tpu_custom_call.1']
    %14 = vsyncpa [#allocation3], 0
    loop: start=0, step=1, limit=8
    $region2: #{tpu_custom_call.1} parent=1 // loop_pre_header
      _
    $region3: #{tpu_custom_call.1} parent=1 // loop_header
      %s16 = sphi 0, %s20
      %p17 = scmp.ge.s32.totalorder %s16, 8
      %s23 = sphi 0, %s35
      %s24 = sphi 0, %s31
      %s25 = sphi 0, %s23
      %s26 = sphi 0, %s24
      %s27 = sphi 0, %s25
      %s28 = sphi 0, %s26
      %s40 = sphi 0, %s42
      %s43 = sphi 0, %s40
      %s44 = sphi 0, %s43
      %s60 = sphi 0, %s44
      %s64 = sphi 0, %s64
      %s66 = sphi 0, %s64
      %s67 = sphi 0, %s66
      %s81 = sphi 0, %s67
      %s85 = sphi 0, %s85
      %s87 = sphi 0, %s85
      %s88 = sphi 0, %s87
      %s102 = sphi 0, %s88
      %s106 = sphi 0, %s106
      %s108 = sphi 0, %s106
      %s109 = sphi 0, %s108
      %s123 = sphi 0, %s109
      %s127 = sphi 0, %s127
      %s129 = sphi 0, %s127
      %s130 = sphi 0, %s129
      %s144 = sphi 0, %s130
      %s148 = sphi 0, %s148
      %s150 = sphi 0, %s148
      %s151 = sphi 0, %s150
      %s165 = sphi 0, %s151
      %s169 = sphi 0, %s169
      %s171 = sphi 0, %s169
      %s172 = sphi 0, %s171
      %s186 = sphi 0, %s172
      %s190 = sphi 0, %s190
      %s192 = sphi 0, %s190
      %s193 = sphi 0, %s192
      %s207 = sphi 0, %s193
      %s211 = sphi 0, %s211
      %s213 = sphi 0, %s211
      %s214 = sphi 0, %s213
      %s228 = sphi 0, %s214
      %s236 = sphi 0, %s238
      %s239 = sphi 0, %s236
      %s240 = sphi 0, %s239
      %s256 = sphi 0, %s240
    $region4: #{tpu_custom_call.1} parent=1 // loop_header_branch
      %19 = sbr.rel (%p17) target = $region8
    $region5: #{tpu_custom_call.1} parent=1 // loop_body
      %s21 = ssub.s32 %s16, 1
      %s22 = ssub.s32 %s16, 2
      %s29 = sadd.s32 1, %s24
      %p30 = scmp.ge.s32.totalorder %s29, 3
      %s31 = scalar_select %p30, 0, %s29
      %s32 = sadd.s32 1, %s23
      %s33 = scalar_select %p30, %s32, %s23
      %p34 = scmp.ge.s32.totalorder %s33, 2
      %s35 = scalar_select %p34, 0, %s33
      %s36 = ssub.s32 %s23, %s35
      %s37 = ssub.s32 %s24, %s31
      %s38 = sor.u32 %s36, %s37
      %p39 = scmp.eq.s32.totalorder %s38, 0
      %s41 = sadd.s32 %s40, 1
      %s42 = scalar_select %p39, %s40, %s41
      %p45 = pneg %p39
      %p46 = scmp.eq.s32.totalorder %s16, 5
      %p47 = por %p45, %p46
      %p48 = scmp.ne.s32.totalorder %s40, %s43
      %p49 = scmp.eq.s32.totalorder %s16, 0
      %p50 = por %p48, %p49
      %p51 = scmp.ne.s32.totalorder %s40, %s43
      %p52 = scmp.eq.s32.totalorder %s21, 5
      %p53 = por %p51, %p52
      %p54 = scmp.ne.s32.totalorder %s43, %s44
      %p55 = scmp.eq.s32.totalorder %s21, 0
      %p56 = por %p54, %p55
      %p57 = scmp.ne.s32.totalorder %s43, %s44
      %p58 = scmp.eq.s32.totalorder %s22, 5
      %p59 = por %p57, %p58
      %p61 = scmp.ne.s32.totalorder %s44, %s60
      %p62 = scmp.eq.s32.totalorder %s22, 0
      %p63 = por %p61, %p62
      %s65 = sadd.s32 %s64, 1
      %p68 = scmp.eq.s32.totalorder %s16, 5
      %p69 = scmp.ne.s32.totalorder %s64, %s66
      %p70 = scmp.eq.s32.totalorder %s16, 0
      %p71 = por %p69, %p70
      %p72 = scmp.ne.s32.totalorder %s64, %s66
      %p73 = scmp.eq.s32.totalorder %s21, 5
      %p74 = por %p72, %p73
      %p75 = scmp.ne.s32.totalorder %s66, %s67
      %p76 = scmp.eq.s32.totalorder %s21, 0
      %p77 = por %p75, %p76
      %p78 = scmp.ne.s32.totalorder %s66, %s67
      %p79 = scmp.eq.s32.totalorder %s22, 5
      %p80 = por %p78, %p79
      %p82 = scmp.ne.s32.totalorder %s67, %s81
      %p83 = scmp.eq.s32.totalorder %s22, 0
      %p84 = por %p82, %p83
      %s86 = sadd.s32 %s85, 1
      %p89 = scmp.eq.s32.totalorder %s16, 5
      %p90 = scmp.ne.s32.totalorder %s85, %s87
      %p91 = scmp.eq.s32.totalorder %s16, 0
      %p92 = por %p90, %p91
      %p93 = scmp.ne.s32.totalorder %s85, %s87
      %p94 = scmp.eq.s32.totalorder %s21, 5
      %p95 = por %p93, %p94
      %p96 = scmp.ne.s32.totalorder %s87, %s88
      %p97 = scmp.eq.s32.totalorder %s21, 0
      %p98 = por %p96, %p97
      %p99 = scmp.ne.s32.totalorder %s87, %s88
      %p100 = scmp.eq.s32.totalorder %s22, 5
      %p101 = por %p99, %p100
      %p103 = scmp.ne.s32.totalorder %s88, %s102
      %p104 = scmp.eq.s32.totalorder %s22, 0
      %p105 = por %p103, %p104
      %s107 = sadd.s32 %s106, 1
      %p110 = scmp.eq.s32.totalorder %s16, 5
      %p111 = scmp.ne.s32.totalorder %s106, %s108
      %p112 = scmp.eq.s32.totalorder %s16, 0
      %p113 = por %p111, %p112
      %p114 = scmp.ne.s32.totalorder %s106, %s108
      %p115 = scmp.eq.s32.totalorder %s21, 5
      %p116 = por %p114, %p115
      %p117 = scmp.ne.s32.totalorder %s108, %s109
      %p118 = scmp.eq.s32.totalorder %s21, 0
      %p119 = por %p117, %p118
      %p120 = scmp.ne.s32.totalorder %s108, %s109
      %p121 = scmp.eq.s32.totalorder %s22, 5
      %p122 = por %p120, %p121
      %p124 = scmp.ne.s32.totalorder %s109, %s123
      %p125 = scmp.eq.s32.totalorder %s22, 0
      %p126 = por %p124, %p125
      %s128 = sadd.s32 %s127, 1
      %p131 = scmp.eq.s32.totalorder %s16, 5
      %p132 = scmp.ne.s32.totalorder %s127, %s129
      %p133 = scmp.eq.s32.totalorder %s16, 0
      %p134 = por %p132, %p133
      %p135 = scmp.ne.s32.totalorder %s127, %s129
      %p136 = scmp.eq.s32.totalorder %s21, 5
      %p137 = por %p135, %p136
      %p138 = scmp.ne.s32.totalorder %s129, %s130
      %p139 = scmp.eq.s32.totalorder %s21, 0
      %p140 = por %p138, %p139
      %p141 = scmp.ne.s32.totalorder %s129, %s130
      %p142 = scmp.eq.s32.totalorder %s22, 5
      %p143 = por %p141, %p142
      %p145 = scmp.ne.s32.totalorder %s130, %s144
      %p146 = scmp.eq.s32.totalorder %s22, 0
      %p147 = por %p145, %p146
      %s149 = sadd.s32 %s148, 1
      %p152 = scmp.eq.s32.totalorder %s16, 5
      %p153 = scmp.ne.s32.totalorder %s148, %s150
      %p154 = scmp.eq.s32.totalorder %s16, 0
      %p155 = por %p153, %p154
      %p156 = scmp.ne.s32.totalorder %s148, %s150
      %p157 = scmp.eq.s32.totalorder %s21, 5
      %p158 = por %p156, %p157
      %p159 = scmp.ne.s32.totalorder %s150, %s151
      %p160 = scmp.eq.s32.totalorder %s21, 0
      %p161 = por %p159, %p160
      %p162 = scmp.ne.s32.totalorder %s150, %s151
      %p163 = scmp.eq.s32.totalorder %s22, 5
      %p164 = por %p162, %p163
      %p166 = scmp.ne.s32.totalorder %s151, %s165
      %p167 = scmp.eq.s32.totalorder %s22, 0
      %p168 = por %p166, %p167
      %s170 = sadd.s32 %s169, 1
      %p173 = scmp.eq.s32.totalorder %s16, 5
      %p174 = scmp.ne.s32.totalorder %s169, %s171
      %p175 = scmp.eq.s32.totalorder %s16, 0
      %p176 = por %p174, %p175
      %p177 = scmp.ne.s32.totalorder %s169, %s171
      %p178 = scmp.eq.s32.totalorder %s21, 5
      %p179 = por %p177, %p178
      %p180 = scmp.ne.s32.totalorder %s171, %s172
      %p181 = scmp.eq.s32.totalorder %s21, 0
      %p182 = por %p180, %p181
      %p183 = scmp.ne.s32.totalorder %s171, %s172
      %p184 = scmp.eq.s32.totalorder %s22, 5
      %p185 = por %p183, %p184
      %p187 = scmp.ne.s32.totalorder %s172, %s186
      %p188 = scmp.eq.s32.totalorder %s22, 0
      %p189 = por %p187, %p188
      %s191 = sadd.s32 %s190, 1
      %p194 = scmp.eq.s32.totalorder %s16, 5
      %p195 = scmp.ne.s32.totalorder %s190, %s192
      %p196 = scmp.eq.s32.totalorder %s16, 0
      %p197 = por %p195, %p196
      %p198 = scmp.ne.s32.totalorder %s190, %s192
      %p199 = scmp.eq.s32.totalorder %s21, 5
      %p200 = por %p198, %p199
      %p201 = scmp.ne.s32.totalorder %s192, %s193
      %p202 = scmp.eq.s32.totalorder %s21, 0
      %p203 = por %p201, %p202
      %p204 = scmp.ne.s32.totalorder %s192, %s193
      %p205 = scmp.eq.s32.totalorder %s22, 5
      %p206 = por %p204, %p205
      %p208 = scmp.ne.s32.totalorder %s193, %s207
      %p209 = scmp.eq.s32.totalorder %s22, 0
      %p210 = por %p208, %p209
      %s212 = sadd.s32 %s211, 1
      %p215 = scmp.eq.s32.totalorder %s16, 5
      %p216 = scmp.ne.s32.totalorder %s211, %s213
      %p217 = scmp.eq.s32.totalorder %s16, 0
      %p218 = por %p216, %p217
      %p219 = scmp.ne.s32.totalorder %s211, %s213
      %p220 = scmp.eq.s32.totalorder %s21, 5
      %p221 = por %p219, %p220
      %p222 = scmp.ne.s32.totalorder %s213, %s214
      %p223 = scmp.eq.s32.totalorder %s21, 0
      %p224 = por %p222, %p223
      %p225 = scmp.ne.s32.totalorder %s213, %s214
      %p226 = scmp.eq.s32.totalorder %s22, 5
      %p227 = por %p225, %p226
      %p229 = scmp.ne.s32.totalorder %s214, %s228
      %p230 = scmp.eq.s32.totalorder %s22, 0
      %p231 = por %p229, %p230
      %s232 = ssub.s32 %s23, %s35
      %s233 = ssub.s32 %s24, %s31
      %s234 = sor.u32 %s232, %s233
      %p235 = scmp.eq.s32.totalorder %s234, 0
      %s237 = sadd.s32 %s236, 1
      %s238 = scalar_select %p235, %s236, %s237
      %p241 = pneg %p235
      %p242 = scmp.eq.s32.totalorder %s16, 5
      %p243 = por %p241, %p242
      %p244 = scmp.ne.s32.totalorder %s236, %s239
      %p245 = scmp.eq.s32.totalorder %s16, 0
      %p246 = por %p244, %p245
      %p247 = scmp.ne.s32.totalorder %s236, %s239
      %p248 = scmp.eq.s32.totalorder %s21, 5
      %p249 = por %p247, %p248
      %p250 = scmp.ne.s32.totalorder %s239, %s240
      %p251 = scmp.eq.s32.totalorder %s21, 0
      %p252 = por %p250, %p251
      %p253 = scmp.ne.s32.totalorder %s239, %s240
      %p254 = scmp.eq.s32.totalorder %s22, 5
      %p255 = por %p253, %p254
      %p257 = scmp.ne.s32.totalorder %s240, %s256
      %p258 = scmp.eq.s32.totalorder %s22, 0
      %p259 = por %p257, %p258
      %p260 = scmp.le.s32.totalorder 1, %s16
      %p261 = scmp.lt.s32.totalorder %s16, 7
      %p262 = pnand %p260, %p261
      %p263 = pneg %p262
      // Predicated region
      $region9: #{tpu_custom_call.1} parent=5 // pred_check
        _
      $region10: #{tpu_custom_call.1} parent=5 // pred_check_branch
        %265 = sbr.rel (%p262) target = $region12
      $region11: #{tpu_custom_call.1} parent=5 // pred_region
        %s266 = ssub.s32 %s16, 1
        // Predicated region
        $region13: #{tpu_custom_call.1} parent=11 // pred_check
          %p267 = pneg %p77
        $region14: #{tpu_custom_call.1} parent=11 // pred_check_branch
          %269 = sbr.rel (%p267) target = $region16
        $region15: #{tpu_custom_call.1} parent=11 // pred_region
          _
        $region16: #{tpu_custom_call.1} parent=11 // pred_fallthru
          _
        // Predicated region
        $region17: #{tpu_custom_call.1} parent=11 // pred_check
          %p270 = pneg %p98
        $region18: #{tpu_custom_call.1} parent=11 // pred_check_branch
          %272 = sbr.rel (%p270) target = $region20
        $region19: #{tpu_custom_call.1} parent=11 // pred_region
          _
        $region20: #{tpu_custom_call.1} parent=11 // pred_fallthru
          _
        // Predicated region
        $region21: #{tpu_custom_call.1} parent=11 // pred_check
          %p273 = pneg %p119
        $region22: #{tpu_custom_call.1} parent=11 // pred_check_branch
          %275 = sbr.rel (%p273) target = $region24
        $region23: #{tpu_custom_call.1} parent=11 // pred_region
          %s277 = ssub.s32 4096, 4096
          %278 = vsyncadd [#allocation3], %s277
          %s279 = sshll.u32 [#allocation2], 4
          %s280 = int_to_ptr.vmem [resolvable:$true] %s279
          %285 = dma.hbm_to_vmem [thread:$0]  %s3, 4096, %s280, [#allocation3], 128, 128, 8
        $region24: #{tpu_custom_call.1} parent=11 // pred_fallthru
          _
        // Predicated region
        $region25: #{tpu_custom_call.1} parent=11 // pred_check
          %p286 = pneg %p140
        $region26: #{tpu_custom_call.1} parent=11 // pred_check_branch
          %288 = sbr.rel (%p286) target = $region28
        $region27: #{tpu_custom_call.1} parent=11 // pred_region
          _
        $region28: #{tpu_custom_call.1} parent=11 // pred_fallthru
          _
        // Predicated region
        $region29: #{tpu_custom_call.1} parent=11 // pred_check
          %p289 = pneg %p161
        $region30: #{tpu_custom_call.1} parent=11 // pred_check_branch
          %291 = sbr.rel (%p289) target = $region32
        $region31: #{tpu_custom_call.1} parent=11 // pred_region
          _
        $region32: #{tpu_custom_call.1} parent=11 // pred_fallthru
          _
        // Predicated region
        $region33: #{tpu_custom_call.1} parent=11 // pred_check
          %p292 = pneg %p182
        $region34: #{tpu_custom_call.1} parent=11 // pred_check_branch
          %294 = sbr.rel (%p292) target = $region36
        $region35: #{tpu_custom_call.1} parent=11 // pred_region
          _
        $region36: #{tpu_custom_call.1} parent=11 // pred_fallthru
          _
        // Predicated region
        $region37: #{tpu_custom_call.1} parent=11 // pred_check
          %p295 = pneg %p203
        $region38: #{tpu_custom_call.1} parent=11 // pred_check_branch
          %297 = sbr.rel (%p295) target = $region40
        $region39: #{tpu_custom_call.1} parent=11 // pred_region
          _
        $region40: #{tpu_custom_call.1} parent=11 // pred_fallthru
          _
        // Predicated region
        $region41: #{tpu_custom_call.1} parent=11 // pred_check
          %p298 = pneg %p224
        $region42: #{tpu_custom_call.1} parent=11 // pred_check_branch
          %300 = sbr.rel (%p298) target = $region44
        $region43: #{tpu_custom_call.1} parent=11 // pred_region
          _
        $region44: #{tpu_custom_call.1} parent=11 // pred_fallthru
          _
      $region12: #{tpu_custom_call.1} parent=5 // pred_fallthru
        _
      %p301 = scmp.lt.s32.totalorder %s16, 6
      // Predicated region
      $region45: #{tpu_custom_call.1} parent=5 // pred_check
        %p302 = pneg %p301
      $region46: #{tpu_custom_call.1} parent=5 // pred_check_branch
        %304 = sbr.rel (%p302) target = $region48
      $region47: #{tpu_custom_call.1} parent=5 // pred_region
        // Predicated region
        $region49: #{tpu_custom_call.1} parent=47 // pred_check
          %p305 = pneg %p50
        $region50: #{tpu_custom_call.1} parent=47 // pred_check_branch
          %307 = sbr.rel (%p305) target = $region52
        $region51: #{tpu_custom_call.1} parent=47 // pred_region
          %p308 = scmp.lt.s32.totalorder %s23, 1
          %s309 = scalar_select %p308, %s23, 1
          %p310 = scmp.lt.s32.totalorder %s24, 2
          %s311 = scalar_select %p310, %s24, 2
          %s312 = smul.addr %s311, 2
          %s313 = smul.addr %s309, 6
          %s314 = sadd.s32 %s312, %s313
          %s315 = smul.addr %s314, 8
          %s316 = scalar_lea.vmem %s0, %s315
        $region52: #{tpu_custom_call.1} parent=47 // pred_fallthru
          _
      $region48: #{tpu_custom_call.1} parent=5 // pred_fallthru
        _
      %p317 = scmp.le.s32.totalorder 1, %s16
      %p318 = scmp.lt.s32.totalorder %s16, 7
      %p319 = pnand %p317, %p318
      %p320 = pneg %p319
      // Predicated region
      $region53: #{tpu_custom_call.1} parent=5 // pred_check
        _
      $region54: #{tpu_custom_call.1} parent=5 // pred_check_branch
        %322 = sbr.rel (%p319) target = $region56
      $region55: #{tpu_custom_call.1} parent=5 // pred_region
        %s323 = ssub.s32 %s16, 1
        // Predicated region
        $region57: #{tpu_custom_call.1} parent=55 // pred_check
          %p324 = pneg %p119
        $region58: #{tpu_custom_call.1} parent=55 // pred_check_branch
          %326 = sbr.rel (%p324) target = $region60
        $region59: #{tpu_custom_call.1} parent=55 // pred_region
          %327 = dma.done [#allocation3], 4096
        $region60: #{tpu_custom_call.1} parent=55 // pred_fallthru
          _
        %p328 = scmp.lt.s32.totalorder %s25, 1
        %s329 = scalar_select %p328, %s25, 1
        %p330 = scmp.lt.s32.totalorder %s26, 2
        %s331 = scalar_select %p330, %s26, 2
        %s332 = smul.addr %s331, 2
        %s333 = smul.addr %s329, 6
        %s334 = sadd.s32 %s332, %s333
        %s335 = smul.addr %s334, 8
        %s336 = scalar_lea.vmem %s0, %s335
        %p337 = pneg %p56
        %p338 = pneg %p53
        %p339 = pneg %p77
        %p340 = pneg %p74
        %p341 = pneg %p98
        %p342 = pneg %p95
        %p343 = pneg %p119
        %p344 = pneg %p116
        %p345 = pneg %p140
        %p346 = pneg %p137
        %p347 = pneg %p161
        %p348 = pneg %p158
        %p349 = pneg %p182
        %p350 = pneg %p179
        %p351 = pneg %p203
        %p352 = pneg %p200
        %p353 = pneg %p224
        %p354 = pneg %p221
        %p355 = pneg %p252
        %p356 = pneg %p249
        %p357 = scmp.lt.s32.totalorder %s25, 1
        %s358 = scalar_select %p357, %s25, 1
        %p359 = scmp.lt.s32.totalorder %s26, 2
        %s360 = scalar_select %p359, %s26, 2
        %s361 = smul.addr %s358, 3
        %s362 = sadd.s32 %s360, %s361
        %s363 = smul.addr %s362, 8
        %s364 = scalar_lea.vmem %s9, %s363
        %p365 = scmp.lt.s32.totalorder %s25, 1
        %s366 = scalar_select %p365, %s25, 1
        %p367 = scmp.lt.s32.totalorder %s26, 2
        %s368 = scalar_select %p367, %s26, 2
        %s369 = smul.addr %s368, 2
        %s370 = smul.addr %s366, 6
        %s371 = sadd.s32 %s369, %s370
        %s372 = smul.addr %s371, 8
        %s373 = scalar_lea.vmem %s0, %s372
        %p374 = scmp.lt.s32.totalorder %s25, 1
        %s375 = scalar_select %p374, %s25, 1
        %p376 = scmp.lt.s32.totalorder %s26, 2
        %s377 = scalar_select %p376, %s26, 2
        %s378 = smul.addr %s375, 3
        %s379 = sadd.s32 %s377, %s378
        %s380 = smul.addr %s379, 8
        %s381 = scalar_lea.vmem %s9, %s380
        %v383 = vld [vmem:[%s373] sm:$0xff]
        %v384 = vld [vmem:[%s373 + $0x8] sm:$0xff]
        %v385 = vadd.f32 %v383, %v384
        %386 = vadd.xlane.f32.xlu0 %v385
        %v387 = vpop.xlane.xlu0 %386
        %v388 = vrcp.pop 256.0
        %v389 = vmul.f32 %v387, %v388
        %v390 = vmul.f32 %v383, %v383
        %v391 = vmul.f32 %v384, %v384
        %v392 = vadd.f32 %v390, %v391
        %393 = vadd.xlane.f32.xlu0 %v392
        %v394 = vpop.xlane.xlu0 %393
        %v395 = vmul.f32 %v394, %v388
        %v396 = vmul.f32 %v389, %v389
        %v397 = vsub.f32 %v395, %v396
        %v398 = vmax.f32 %v397, 0.0
        %v399 = vsub.f32 %v383, %v389
        %v400 = vsub.f32 %v384, %v389
        %v401 = vadd.f32 %v398, 1e-05
        %v402 = vrsqrt.pop %v401
        %v403 = vmul.f32 %v399, %v402
        %v404 = vmul.f32 %v400, %v402
        %v405 = vld [vmem:[%s1] sm:$0x3]
        %v407 = vlaneseq
        %v408 = vshrl.u32 %v407, 7
        %v409 = vsub.s32 0, %v408
        %v410 = vrot.slane %v405, %v409
        %v411 = vlaneseq
        %v412 = vshrl.u32 %v411, 7
        %v413 = vsub.s32 1, %v412
        %v414 = vrot.slane %v405, %v413
        %v417 = vmul.f32 %v403, %v410
        %v418 = vmul.f32 %v404, %v414
        %v419 = vld [vmem:[%s2] sm:$0x3]
        %v421 = vlaneseq
        %v422 = vshrl.u32 %v421, 7
        %v423 = vsub.s32 0, %v422
        %v424 = vrot.slane %v419, %v423
        %v425 = vlaneseq
        %v426 = vshrl.u32 %v425, 7
        %v427 = vsub.s32 1, %v426
        %v428 = vrot.slane %v419, %v427
        %v431 = vadd.f32 %v417, %v424
        %v432 = vadd.f32 %v418, %v428
        %v433 = vpack.c.bf16 %v431, %v431
        %v434 = vpack.c.bf16 %v432, %v432
        %v435 = vld [vmem:[#allocation2] sm:$0xff]
        %v436 = vld [vmem:[#allocation2 + $0x8] sm:$0xff]
        %v437 = vld [vmem:[#allocation2 + $0x10] sm:$0xff]
        %v438 = vld [vmem:[#allocation2 + $0x18] sm:$0xff]
        %v439 = vld [vmem:[#allocation2 + $0x20] sm:$0xff]
        %v440 = vld [vmem:[#allocation2 + $0x28] sm:$0xff]
        %v441 = vld [vmem:[#allocation2 + $0x30] sm:$0xff]
        %v442 = vld [vmem:[#allocation2 + $0x38] sm:$0xff]
        %v443 = vld [vmem:[#allocation2 + $0x40] sm:$0xff]
        %v444 = vld [vmem:[#allocation2 + $0x48] sm:$0xff]
        %v445 = vld [vmem:[#allocation2 + $0x50] sm:$0xff]
        %v446 = vld [vmem:[#allocation2 + $0x58] sm:$0xff]
        %v447 = vld [vmem:[#allocation2 + $0x60] sm:$0xff]
        %v448 = vld [vmem:[#allocation2 + $0x68] sm:$0xff]
        %v449 = vld [vmem:[#allocation2 + $0x70] sm:$0xff]
        %v450 = vld [vmem:[#allocation2 + $0x78] sm:$0xff]
        %v451 = vld [vmem:[#allocation2 + $0x80] sm:$0xff]
        %v452 = vld [vmem:[#allocation2 + $0x88] sm:$0xff]
        %v453 = vld [vmem:[#allocation2 + $0x90] sm:$0xff]
        %v454 = vld [vmem:[#allocation2 + $0x98] sm:$0xff]
        %v455 = vld [vmem:[#allocation2 + $0xa0] sm:$0xff]
        %v456 = vld [vmem:[#allocation2 + $0xa8] sm:$0xff]
        %v457 = vld [vmem:[#allocation2 + $0xb0] sm:$0xff]
        %v458 = vld [vmem:[#allocation2 + $0xb8] sm:$0xff]
        %v459 = vld [vmem:[#allocation2 + $0xc0] sm:$0xff]
        %v460 = vld [vmem:[#allocation2 + $0xc8] sm:$0xff]
        %v461 = vld [vmem:[#allocation2 + $0xd0] sm:$0xff]
        %v462 = vld [vmem:[#allocation2 + $0xd8] sm:$0xff]
        %v463 = vld [vmem:[#allocation2 + $0xe0] sm:$0xff]
        %v464 = vld [vmem:[#allocation2 + $0xe8] sm:$0xff]
        %v465 = vld [vmem:[#allocation2 + $0xf0] sm:$0xff]
        %v466 = vld [vmem:[#allocation2 + $0xf8] sm:$0xff]
        %v467 = vld [vmem:[%s4] sm:$0x3]
        %v468 = vunpack.c.l.bf16 %v467
        %v470 = vlaneseq
        %v471 = vshrl.u32 %v470, 7
        %v472 = vsub.s32 0, %v471
        %v473 = vrot.slane %v468, %v472
        %v474 = vlaneseq
        %v475 = vshrl.u32 %v474, 7
        %v476 = vsub.s32 2, %v475
        %v477 = vrot.slane %v468, %v476
        %v480 = vlaneseq
        %v481 = vshrl.u32 %v480, 7
        %v482 = vsub.s32 0, %v481
        %v483 = vrot.slane %v473, %v482
        %v484 = vlaneseq
        %v485 = vshrl.u32 %v484, 7
        %v486 = vsub.s32 0, %v485
        %v487 = vrot.slane %v477, %v486
        %v520 = vunpack.c.l.b16 %v435
        %v521 = vunpack.c.h.b16 %v435
        %v522 = vunpack.c.l.b16 %v436
        %v523 = vunpack.c.h.b16 %v436
        %v524 = vunpack.c.l.b16 %v437
        %v525 = vunpack.c.h.b16 %v437
        %v526 = vunpack.c.l.b16 %v438
        %v527 = vunpack.c.h.b16 %v438
        %v528 = vunpack.c.l.b16 %v439
        %v529 = vunpack.c.h.b16 %v439
        %v530 = vunpack.c.l.b16 %v440
        %v531 = vunpack.c.h.b16 %v440
        %v532 = vunpack.c.l.b16 %v441
        %v533 = vunpack.c.h.b16 %v441
        %v534 = vunpack.c.l.b16 %v442
        %v535 = vunpack.c.h.b16 %v442
        %v536 = vunpack.c.l.b16 %v443
        %v537 = vunpack.c.h.b16 %v443
        %v538 = vunpack.c.l.b16 %v444
        %v539 = vunpack.c.h.b16 %v444
        %v540 = vunpack.c.l.b16 %v445
        %v541 = vunpack.c.h.b16 %v445
        %v542 = vunpack.c.l.b16 %v446
        %v543 = vunpack.c.h.b16 %v446
        %v544 = vunpack.c.l.b16 %v447
        %v545 = vunpack.c.h.b16 %v447
        %v546 = vunpack.c.l.b16 %v448
        %v547 = vunpack.c.h.b16 %v448
        %v548 = vunpack.c.l.b16 %v449
        %v549 = vunpack.c.h.b16 %v449
        %v550 = vunpack.c.l.b16 %v450
        %v551 = vunpack.c.h.b16 %v450
        %v552 = vunpack.c.l.b16 %v451
        %v553 = vunpack.c.h.b16 %v451
        %v554 = vunpack.c.l.b16 %v452
        %v555 = vunpack.c.h.b16 %v452
        %v556 = vunpack.c.l.b16 %v453
        %v557 = vunpack.c.h.b16 %v453
        %v558 = vunpack.c.l.b16 %v454
        %v559 = vunpack.c.h.b16 %v454
        %v560 = vunpack.c.l.b16 %v455
        %v561 = vunpack.c.h.b16 %v455
        %v562 = vunpack.c.l.b16 %v456
        %v563 = vunpack.c.h.b16 %v456
        %v564 = vunpack.c.l.b16 %v457
        %v565 = vunpack.c.h.b16 %v457
        %v566 = vunpack.c.l.b16 %v458
        %v567 = vunpack.c.h.b16 %v458
        %v568 = vunpack.c.l.b16 %v459
        %v569 = vunpack.c.h.b16 %v459
        %v570 = vunpack.c.l.b16 %v460
        %v571 = vunpack.c.h.b16 %v460
        %v572 = vunpack.c.l.b16 %v461
        %v573 = vunpack.c.h.b16 %v461
        %v574 = vunpack.c.l.b16 %v462
        %v575 = vunpack.c.h.b16 %v462
        %v576 = vunpack.c.l.b16 %v463
        %v577 = vunpack.c.h.b16 %v463
        %v578 = vunpack.c.l.b16 %v464
        %v579 = vunpack.c.h.b16 %v464
        %v580 = vunpack.c.l.b16 %v465
        %v581 = vunpack.c.h.b16 %v465
        %v582 = vunpack.c.l.b16 %v466
        %v583 = vunpack.c.h.b16 %v466
        %v584 = vpack.c.b16 %v522, %v520
        %v585 = vpack.c.b16 %v523, %v521
        %v586 = vpack.c.b16 %v526, %v524
        %v587 = vpack.c.b16 %v527, %v525
        %v588 = vpack.c.b16 %v530, %v528
        %v589 = vpack.c.b16 %v531, %v529
        %v590 = vpack.c.b16 %v534, %v532
        %v591 = vpack.c.b16 %v535, %v533
        %v592 = vpack.c.b16 %v538, %v536
        %v593 = vpack.c.b16 %v539, %v537
        %v594 = vpack.c.b16 %v542, %v540
        %v595 = vpack.c.b16 %v543, %v541
        %v596 = vpack.c.b16 %v546, %v544
        %v597 = vpack.c.b16 %v547, %v545
        %v598 = vpack.c.b16 %v550, %v548
        %v599 = vpack.c.b16 %v551, %v549
        %v600 = vpack.c.b16 %v554, %v552
        %v601 = vpack.c.b16 %v555, %v553
        %v602 = vpack.c.b16 %v558, %v556
        %v603 = vpack.c.b16 %v559, %v557
        %v604 = vpack.c.b16 %v562, %v560
        %v605 = vpack.c.b16 %v563, %v561
        %v606 = vpack.c.b16 %v566, %v564
        %v607 = vpack.c.b16 %v567, %v565
        %v608 = vpack.c.b16 %v570, %v568
        %v609 = vpack.c.b16 %v571, %v569
        %v610 = vpack.c.b16 %v574, %v572
        %v611 = vpack.c.b16 %v575, %v573
        %v612 = vpack.c.b16 %v578, %v576
        %v613 = vpack.c.b16 %v579, %v577
        %v614 = vpack.c.b16 %v582, %v580
        %v615 = vpack.c.b16 %v583, %v581
        %648 = vmatprep.subr.bf16.mxu0 %v585
        %649 = vmatpush1.bf16.msra.mxu0 %v584
        %650 = vmatprep.subr.bf16.mxu0 %v587
        %651 = vmatpush1.bf16.msra.mxu0 %v586
        %652 = vmatprep.subr.bf16.mxu0 %v589
        %653 = vmatpush1.bf16.msra.mxu0 %v588
        %654 = vmatprep.subr.bf16.mxu0 %v591
        %655 = vmatpush1.bf16.msra.mxu0 %v590
        %656 = vmatprep.subr.bf16.mxu0 %v593
        %657 = vmatpush1.bf16.msra.mxu0 %v592
        %658 = vmatprep.subr.bf16.mxu0 %v595
        %659 = vmatpush1.bf16.msra.mxu0 %v594
        %660 = vmatprep.subr.bf16.mxu0 %v597
        %661 = vmatpush1.bf16.msra.mxu0 %v596
        %662 = vmatprep.subr.bf16.mxu0 %v599
        %663 = vmatpush1.bf16.msra.mxu0 %v598
        %664 = vmatprep.subr.bf16.mxu0 %v601
        %665 = vmatpush1.bf16.msra.mxu0 %v600
        %666 = vmatprep.subr.bf16.mxu0 %v603
        %667 = vmatpush1.bf16.msra.mxu0 %v602
        %668 = vmatprep.subr.bf16.mxu0 %v605
        %669 = vmatpush1.bf16.msra.mxu0 %v604
        %670 = vmatprep.subr.bf16.mxu0 %v607
        %671 = vmatpush1.bf16.msra.mxu0 %v606
        %672 = vmatprep.subr.bf16.mxu0 %v609
        %673 = vmatpush1.bf16.msra.mxu0 %v608
        %674 = vmatprep.subr.bf16.mxu0 %v611
        %675 = vmatpush1.bf16.msra.mxu0 %v610
        %676 = vmatprep.subr.bf16.mxu0 %v613
        %677 = vmatpush1.bf16.msra.mxu0 %v612
        %678 = vmatprep.subr.bf16.mxu0 %v615
        %679 = vmatpush1.bf16.msra.mxu0 %v614
        %680 = vmatprep.mubr.bf16.mxu0 %v434
        %681 = vmatmul.mubr.bf16.gmra.mrb[0].mxu0 %v433
        %v682 = vpop.f32.mrb[0].mxu0
        %v683 = vadd.f32 %v483, %v682
        %v684 = vpop.f32.mrb[0].mxu0
        %v685 = vadd.f32 %v487, %v684
        %v686 = vpop.f32.mrb[0].mxu0
        %v687 = vpop.f32.mrb[0].mxu0
        %688 = vdwg.mxu0
        %v689 = vmul.f32 %v683, 0.5
        %v690 = vmul.f32 %v685, 0.5
        %v691 = vmul.f32 %v683, 0.70710677
        %v692 = vmul.f32 %v685, 0.70710677
        %vm693 = vcmp.lt.f32.partialorder %v691, 0.0
        %vm694 = vcmp.lt.f32.partialorder %v692, 0.0
        %v695 = vsel %vm693, -1.0, 1.0
        %v696 = vsel %vm694, -1.0, 1.0
        %v697 = vand.u32 2147483647, %v691
        %v698 = vand.u32 2147483647, %v692
        %v699 = vmul.f32 %v697, 0.3275911
        %v700 = vmul.f32 %v698, 0.3275911
        %v701 = vadd.f32 %v699, 1.0
        %v702 = vadd.f32 %v700, 1.0
        %v703 = vrcp.pop %v701
        %v704 = vmul.f32 1.0, %v703
        %v705 = vrcp.pop %v702
        %v706 = vmul.f32 1.0, %v705
        %v707 = vmul.f32 %v704, 1.0614054
        %v708 = vmul.f32 %v706, 1.0614054
        %v709 = vadd.f32 %v707, -1.4531521
        %v710 = vadd.f32 %v708, -1.4531521
        %v711 = vmul.f32 %v709, %v704
        %v712 = vmul.f32 %v710, %v706
        %v713 = vadd.f32 %v711, 1.4214138
        %v714 = vadd.f32 %v712, 1.4214138
        %v715 = vmul.f32 %v713, %v704
        %v716 = vmul.f32 %v714, %v706
        %v717 = vadd.f32 %v715, -0.28449672
        %v718 = vadd.f32 %v716, -0.28449672
        %v719 = vmul.f32 %v717, %v704
        %v720 = vmul.f32 %v718, %v706
        %v721 = vadd.f32 %v719, 0.2548296
        %v722 = vadd.f32 %v720, 0.2548296
        %v723 = vmul.f32 %v721, %v704
        %v724 = vmul.f32 %v722, %v706
        %v725 = vsub.f32 0.0, %v697
        %v726 = vsub.f32 0.0, %v698
        %v727 = vmul.f32 %v725, %v697
        %v728 = vmul.f32 %v726, %v698
        %v729 = vmul.f32 %v727, 1.442695
        %v730 = vpow.pop %v729
        %v731 = vmul.f32 %v728, 1.442695
        %v732 = vpow.pop %v731
        %v733 = vmul.f32 %v723, %v730
        %v734 = vmul.f32 %v724, %v732
        %v735 = vsub.f32 1.0, %v733
        %v736 = vsub.f32 1.0, %v734
        %v737 = vmul.f32 %v695, %v735
        %v738 = vmul.f32 %v696, %v736
        %v739 = vadd.f32 %v737, 1.0
        %v740 = vadd.f32 %v738, 1.0
        %v741 = vmul.f32 %v689, %v739
        %v742 = vmul.f32 %v690, %v740
        %v743 = vpack.c.bf16 %v741, %v741
        %v744 = vpack.c.bf16 %v742, %v742
        %v745 = vld [vmem:[%s5] sm:$0xf]
        %v746 = vld [vmem:[%s5 + $0x4] sm:$0xf]
        %v747 = vld [vmem:[%s5 + $0x8] sm:$0xf]
        %v748 = vld [vmem:[%s5 + $0xc] sm:$0xf]
        %v749 = vld [vmem:[%s5 + $0x10] sm:$0xf]
        %v750 = vld [vmem:[%s5 + $0x14] sm:$0xf]
        %v751 = vld [vmem:[%s5 + $0x18] sm:$0xf]
        %v752 = vld [vmem:[%s5 + $0x1c] sm:$0xf]
        %v753 = vld [vmem:[%s5 + $0x20] sm:$0xf]
        %v754 = vld [vmem:[%s5 + $0x24] sm:$0xf]
        %v755 = vld [vmem:[%s5 + $0x28] sm:$0xf]
        %v756 = vld [vmem:[%s5 + $0x2c] sm:$0xf]
        %v757 = vld [vmem:[%s5 + $0x30] sm:$0xf]
        %v758 = vld [vmem:[%s5 + $0x34] sm:$0xf]
        %v759 = vld [vmem:[%s5 + $0x38] sm:$0xf]
        %v760 = vld [vmem:[%s5 + $0x3c] sm:$0xf]
        %v761 = vld [vmem:[%s5 + $0x40] sm:$0xf]
        %v762 = vld [vmem:[%s5 + $0x44] sm:$0xf]
        %v763 = vld [vmem:[%s5 + $0x48] sm:$0xf]
        %v764 = vld [vmem:[%s5 + $0x4c] sm:$0xf]
        %v765 = vld [vmem:[%s5 + $0x50] sm:$0xf]
        %v766 = vld [vmem:[%s5 + $0x54] sm:$0xf]
        %v767 = vld [vmem:[%s5 + $0x58] sm:$0xf]
        %v768 = vld [vmem:[%s5 + $0x5c] sm:$0xf]
        %v769 = vld [vmem:[%s5 + $0x60] sm:$0xf]
        %v770 = vld [vmem:[%s5 + $0x64] sm:$0xf]
        %v771 = vld [vmem:[%s5 + $0x68] sm:$0xf]
        %v772 = vld [vmem:[%s5 + $0x6c] sm:$0xf]
        %v773 = vld [vmem:[%s5 + $0x70] sm:$0xf]
        %v774 = vld [vmem:[%s5 + $0x74] sm:$0xf]
        %v775 = vld [vmem:[%s5 + $0x78] sm:$0xf]
        %v776 = vld [vmem:[%s5 + $0x7c] sm:$0xf]
        %v777 = vld [vmem:[%s6] sm:$0x1]
        %v778 = vunpack.c.l.bf16 %v777
        %v779 = vlaneseq
        %v780 = vshrl.u32 %v779, 7
        %v781 = vsub.s32 0, %v780
        %v782 = vrot.slane %v778, %v781
        %v815 = vunpack.c.l.b16 %v745
        %v816 = vunpack.c.l.b16 %v746
        %v817 = vunpack.c.l.b16 %v747
        %v818 = vunpack.c.l.b16 %v748
        %v819 = vunpack.c.l.b16 %v749
        %v820 = vunpack.c.l.b16 %v750
        %v821 = vunpack.c.l.b16 %v751
        %v822 = vunpack.c.l.b16 %v752
        %v823 = vunpack.c.l.b16 %v753
        %v824 = vunpack.c.l.b16 %v754
        %v825 = vunpack.c.l.b16 %v755
        %v826 = vunpack.c.l.b16 %v756
        %v827 = vunpack.c.l.b16 %v757
        %v828 = vunpack.c.l.b16 %v758
        %v829 = vunpack.c.l.b16 %v759
        %v830 = vunpack.c.l.b16 %v760
        %v831 = vunpack.c.l.b16 %v761
        %v832 = vunpack.c.l.b16 %v762
        %v833 = vunpack.c.l.b16 %v763
        %v834 = vunpack.c.l.b16 %v764
        %v835 = vunpack.c.l.b16 %v765
        %v836 = vunpack.c.l.b16 %v766
        %v837 = vunpack.c.l.b16 %v767
        %v838 = vunpack.c.l.b16 %v768
        %v839 = vunpack.c.l.b16 %v769
        %v840 = vunpack.c.l.b16 %v770
        %v841 = vunpack.c.l.b16 %v771
        %v842 = vunpack.c.l.b16 %v772
        %v843 = vunpack.c.l.b16 %v773
        %v844 = vunpack.c.l.b16 %v774
        %v845 = vunpack.c.l.b16 %v775
        %v846 = vunpack.c.l.b16 %v776
        %v847 = vpack.c.b16 %v816, %v815
        %v848 = vpack.c.b16 %v818, %v817
        %v849 = vpack.c.b16 %v820, %v819
        %v850 = vpack.c.b16 %v822, %v821
        %v851 = vpack.c.b16 %v824, %v823
        %v852 = vpack.c.b16 %v826, %v825
        %v853 = vpack.c.b16 %v828, %v827
        %v854 = vpack.c.b16 %v830, %v829
        %v855 = vpack.c.b16 %v832, %v831
        %v856 = vpack.c.b16 %v834, %v833
        %v857 = vpack.c.b16 %v836, %v835
        %v858 = vpack.c.b16 %v838, %v837
        %v859 = vpack.c.b16 %v840, %v839
        %v860 = vpack.c.b16 %v842, %v841
        %v861 = vpack.c.b16 %v844, %v843
        %v862 = vpack.c.b16 %v846, %v845
        %879 = vmatprep.subr.bf16.mxu0 0
        %880 = vmatpush1.bf16.msra.mxu0 %v847
        %881 = vmatprep.subr.bf16.mxu0 0
        %882 = vmatpush1.bf16.msra.mxu0 %v848
        %883 = vmatprep.subr.bf16.mxu0 0
        %884 = vmatpush1.bf16.msra.mxu0 %v849
        %885 = vmatprep.subr.bf16.mxu0 0
        %886 = vmatpush1.bf16.msra.mxu0 %v850
        %887 = vmatprep.subr.bf16.mxu0 0
        %888 = vmatpush1.bf16.msra.mxu0 %v851
        %889 = vmatprep.subr.bf16.mxu0 0
        %890 = vmatpush1.bf16.msra.mxu0 %v852
        %891 = vmatprep.subr.bf16.mxu0 0
        %892 = vmatpush1.bf16.msra.mxu0 %v853
        %893 = vmatprep.subr.bf16.mxu0 0
        %894 = vmatpush1.bf16.msra.mxu0 %v854
        %895 = vmatprep.subr.bf16.mxu0 0
        %896 = vmatpush1.bf16.msra.mxu0 %v855
        %897 = vmatprep.subr.bf16.mxu0 0
        %898 = vmatpush1.bf16.msra.mxu0 %v856
        %899 = vmatprep.subr.bf16.mxu0 0
        %900 = vmatpush1.bf16.msra.mxu0 %v857
        %901 = vmatprep.subr.bf16.mxu0 0
        %902 = vmatpush1.bf16.msra.mxu0 %v858
        %903 = vmatprep.subr.bf16.mxu0 0
        %904 = vmatpush1.bf16.msra.mxu0 %v859
        %905 = vmatprep.subr.bf16.mxu0 0
        %906 = vmatpush1.bf16.msra.mxu0 %v860
        %907 = vmatprep.subr.bf16.mxu0 0
        %908 = vmatpush1.bf16.msra.mxu0 %v861
        %909 = vmatprep.subr.bf16.mxu0 0
        %910 = vmatpush1.bf16.msra.mxu0 %v862
        %911 = vmatprep.mubr.bf16.mxu0 %v744
        %912 = vmatmul.mubr.bf16.gmra.mrb[0].mxu0 %v743
        %v913 = vpop.f32.mrb[0].mxu0
        %v914 = vadd.f32 %v782, %v913
        %v915 = vpop.f32.mrb[0].mxu0
        %v916 = vpop.f32.mrb[0].mxu0
        %v917 = vpop.f32.mrb[0].mxu0
        %918 = vdwg.mxu0
        %919 = vadd.xlane.f32.xlu0 %v914
        %v920 = vpop.xlane.xlu0 %919
        %v921 = vrcp.pop 128.0
        %v922 = vmul.f32 %v920, %v921
        %v923 = vmul.f32 %v914, %v914
        %924 = vadd.xlane.f32.xlu0 %v923
        %v925 = vpop.xlane.xlu0 %924
        %v926 = vmul.f32 %v925, %v921
        %v927 = vmul.f32 %v922, %v922
        %v928 = vsub.f32 %v926, %v927
        %v929 = vmax.f32 %v928, 0.0
        %v930 = vsub.f32 %v914, %v922
        %v931 = vadd.f32 %v929, 1e-05
        %v932 = vrsqrt.pop %v931
        %v933 = vmul.f32 %v930, %v932
        %v934 = vld [vmem:[%s7] sm:$0x1]
        %v936 = vlaneseq
        %v937 = vshrl.u32 %v936, 7
        %v938 = vsub.s32 0, %v937
        %v939 = vrot.slane %v934, %v938
        %v941 = vmul.f32 %v933, %v939
        %v942 = vld [vmem:[%s8] sm:$0x1]
        %v944 = vlaneseq
        %v945 = vshrl.u32 %v944, 7
        %v946 = vsub.s32 0, %v945
        %v947 = vrot.slane %v942, %v946
        %v949 = vadd.f32 %v941, %v947
        %950 = vst [vmem:[%s381] sm:$0xff] %v949
        %p951 = scmp.lt.s32.totalorder %s25, 1
        %s952 = scalar_select %p951, %s25, 1
        %p953 = scmp.lt.s32.totalorder %s26, 2
        %s954 = scalar_select %p953, %s26, 2
        %s955 = smul.addr %s952, 3
        %s956 = sadd.s32 %s954, %s955
        %s957 = smul.addr %s956, 8
        %s958 = scalar_lea.vmem %s9, %s957
        // Predicated region
        $region61: #{tpu_custom_call.1} parent=55 // pred_check
          %p959 = pneg %p249
        $region62: #{tpu_custom_call.1} parent=55 // pred_check_branch
          %961 = sbr.rel (%p959) target = $region64
        $region63: #{tpu_custom_call.1} parent=55 // pred_region
          _
        $region64: #{tpu_custom_call.1} parent=55 // pred_fallthru
          _
      $region56: #{tpu_custom_call.1} parent=5 // pred_fallthru
        _
      %p962 = scmp.le.s32.totalorder 2, %s16
      // Predicated region
      $region65: #{tpu_custom_call.1} parent=5 // pred_check
        %p963 = pneg %p962
      $region66: #{tpu_custom_call.1} parent=5 // pred_check_branch
        %965 = sbr.rel (%p963) target = $region68
      $region67: #{tpu_custom_call.1} parent=5 // pred_region
        %s966 = ssub.s32 %s16, 2
        // Predicated region
        $region69: #{tpu_custom_call.1} parent=67 // pred_check
          %p967 = pneg %p255
        $region70: #{tpu_custom_call.1} parent=67 // pred_check_branch
          %969 = sbr.rel (%p967) target = $region72
        $region71: #{tpu_custom_call.1} parent=67 // pred_region
          %p970 = scmp.lt.s32.totalorder %s27, 1
          %s971 = scalar_select %p970, %s27, 1
          %p972 = scmp.lt.s32.totalorder %s28, 2
          %s973 = scalar_select %p972, %s28, 2
          %s974 = smul.addr %s971, 3
          %s975 = sadd.s32 %s973, %s974
          %s976 = smul.addr %s975, 8
          %s977 = scalar_lea.vmem %s9, %s976
        $region72: #{tpu_custom_call.1} parent=67 // pred_fallthru
          _
      $region68: #{tpu_custom_call.1} parent=5 // pred_fallthru
        _
    $region6: #{tpu_custom_call.1} parent=1 // loop_footer
      %s20 = sadd.s32 1, %s16
    $region7: #{tpu_custom_call.1} parent=1 // loop_footer_branch
      %15 = sbr.rel target = $region3
    $region8: #{tpu_custom_call.1} parent=1 // loop_exit
      _
    %978 = vsyncpa [#allocation3], 1
    %s979 = scalar_lea.sflag [#allocation3], 1
    %980 = vsyncpa %s979, 1

// kernel: tpu_custom_call.1
$region0: #{tpu_custom_call.1}
  #allocation0 [shape = 'u32[]', space=smem, size = 0x4, offset = 0x4, fixed_abs, tag = 'smem constant byte address 0x4 - core index']
  #allocation1 [shape = 'u32[144,128]{1,0:T(1,128)}', space=vmem, size = 0x12000, scoped, tag = 'internal scratch']
  %s0 = inlined_call_operand.vmem [shape: f32[2,18,256], index: 0, kind: input, shape index: {}]
  %s1 = inlined_call_operand.vmem [shape: f32[1,256], index: 1, kind: input, shape index: {}]
  %s2 = inlined_call_operand.vmem [shape: f32[1,256], index: 2, kind: input, shape index: {}]
  %s3 = inlined_call_operand.hbm [shape: bf16[256,256], index: 3, kind: input, shape index: {}]
  %s4 = inlined_call_operand.vmem [shape: bf16[1,256], index: 4, kind: input, shape index: {}]
  %s5 = inlined_call_operand.vmem [shape: bf16[256,128], index: 5, kind: input, shape index: {}]
  %s6 = inlined_call_operand.vmem [shape: bf16[1,128], index: 6, kind: input, shape index: {}]
  %s7 = inlined_call_operand.vmem [shape: f32[1,128], index: 7, kind: input, shape index: {}]
  %s8 = inlined_call_operand.vmem [shape: f32[1,128], index: 8, kind: input, shape index: {}]
  %s9 = inlined_call_operand.vmem [shape: f32[2,18,128], index: 9, kind: output, shape index: {}]
  %s10 = sld [smem:[#allocation0]]
  $region73: #{tpu_custom_call.1} parent=0
    _
  %s12 = ssub.s32 1, %s10
  %s13 = scalar_select 0, %s12, %s10
  $region1: #{tpu_custom_call.1} parent=0
    #allocation2 [shape = 'u8[131072]{0}', space=vmem, size = 0x20000, scoped, tag = 'input window, operand 3, single buffered']
    #allocation3 [shape = 's32[2]{0}', space=sflag, size = 0x8, scoped, tag = 'scoped memory for tpu_custom_call.1']
    %14 = vsyncpa [#allocation3], 0
    loop: start=0, step=1, limit=8
    $region2: #{tpu_custom_call.1} parent=1 // loop_pre_header
      _
    $region3: #{tpu_custom_call.1} parent=1 // loop_header
      %s16 = sphi 0, %s20
      %p17 = scmp.ge.s32.totalorder %s16, 8
      %s23 = sphi 0, %s35
      %s24 = sphi 0, %s31
      %s25 = sphi 0, %s23
      %s26 = sphi 0, %s24
      %s27 = sphi 0, %s25
      %s28 = sphi 0, %s26
      %s40 = sphi 0, %s42
      %s43 = sphi 0, %s40
      %s44 = sphi 0, %s43
      %s60 = sphi 0, %s44
      %s64 = sphi 0, %s64
      %s66 = sphi 0, %s64
      %s67 = sphi 0, %s66
      %s81 = sphi 0, %s67
      %s85 = sphi 0, %s85
      %s87 = sphi 0, %s85
      %s88 = sphi 0, %s87
      %s102 = sphi 0, %s88
      %s106 = sphi 0, %s106
      %s108 = sphi 0, %s106
      %s109 = sphi 0, %s108
      %s123 = sphi 0, %s109
      %s127 = sphi 0, %s127
      %s129 = sphi 0, %s127
      %s130 = sphi 0, %s129
      %s144 = sphi 0, %s130
      %s148 = sphi 0, %s148
      %s150 = sphi 0, %s148
      %s151 = sphi 0, %s150
      %s165 = sphi 0, %s151
      %s169 = sphi 0, %s169
      %s171 = sphi 0, %s169
      %s172 = sphi 0, %s171
      %s186 = sphi 0, %s172
      %s190 = sphi 0, %s190
      %s192 = sphi 0, %s190
      %s193 = sphi 0, %s192
      %s207 = sphi 0, %s193
      %s211 = sphi 0, %s211
      %s213 = sphi 0, %s211
      %s214 = sphi 0, %s213
      %s228 = sphi 0, %s214
      %s236 = sphi 0, %s238
      %s239 = sphi 0, %s236
      %s240 = sphi 0, %s239
      %s256 = sphi 0, %s240
    $region4: #{tpu_custom_call.1} parent=1 // loop_header_branch
      %19 = sbr.rel (%p17) target = $region8
    $region5: #{tpu_custom_call.1} parent=1 // loop_body
      %s21 = ssub.s32 %s16, 1
      %s22 = ssub.s32 %s16, 2
      %s29 = sadd.s32 1, %s24
      %p30 = scmp.ge.s32.totalorder %s29, 3
      %s31 = scalar_select %p30, 0, %s29
      %s32 = sadd.s32 1, %s23
      %s33 = scalar_select %p30, %s32, %s23
      %p34 = scmp.ge.s32.totalorder %s33, 2
      %s35 = scalar_select %p34, 0, %s33
      %s36 = ssub.s32 %s23, %s35
      %s37 = ssub.s32 %s24, %s31
      %s38 = sor.u32 %s36, %s37
      %p39 = scmp.eq.s32.totalorder %s38, 0
      %s41 = sadd.s32 %s40, 1
      %s42 = scalar_select %p39, %s40, %s41
      %p45 = pneg %p39
      %p46 = scmp.eq.s32.totalorder %s16, 5
      %p47 = por %p45, %p46
      %p48 = scmp.ne.s32.totalorder %s40, %s43
      %p49 = scmp.eq.s32.totalorder %s16, 0
      %p50 = por %p48, %p49
      %p51 = scmp.ne.s32.totalorder %s40, %s43
      %p52 = scmp.eq.s32.totalorder %s21, 5
      %p53 = por %p51, %p52
      %p54 = scmp.ne.s32.totalorder %s43, %s44
      %p55 = scmp.eq.s32.totalorder %s21, 0
      %p56 = por %p54, %p55
      %p57 = scmp.ne.s32.totalorder %s43, %s44
      %p58 = scmp.eq.s32.totalorder %s22, 5
      %p59 = por %p57, %p58
      %p61 = scmp.ne.s32.totalorder %s44, %s60
      %p62 = scmp.eq.s32.totalorder %s22, 0
      %p63 = por %p61, %p62
      %s65 = sadd.s32 %s64, 1
      %p68 = scmp.eq.s32.totalorder %s16, 5
      %p69 = scmp.ne.s32.totalorder %s64, %s66
      %p70 = scmp.eq.s32.totalorder %s16, 0
      %p71 = por %p69, %p70
      %p72 = scmp.ne.s32.totalorder %s64, %s66
      %p73 = scmp.eq.s32.totalorder %s21, 5
      %p74 = por %p72, %p73
      %p75 = scmp.ne.s32.totalorder %s66, %s67
      %p76 = scmp.eq.s32.totalorder %s21, 0
      %p77 = por %p75, %p76
      %p78 = scmp.ne.s32.totalorder %s66, %s67
      %p79 = scmp.eq.s32.totalorder %s22, 5
      %p80 = por %p78, %p79
      %p82 = scmp.ne.s32.totalorder %s67, %s81
      %p83 = scmp.eq.s32.totalorder %s22, 0
      %p84 = por %p82, %p83
      %s86 = sadd.s32 %s85, 1
      %p89 = scmp.eq.s32.totalorder %s16, 5
      %p90 = scmp.ne.s32.totalorder %s85, %s87
      %p91 = scmp.eq.s32.totalorder %s16, 0
      %p92 = por %p90, %p91
      %p93 = scmp.ne.s32.totalorder %s85, %s87
      %p94 = scmp.eq.s32.totalorder %s21, 5
      %p95 = por %p93, %p94
      %p96 = scmp.ne.s32.totalorder %s87, %s88
      %p97 = scmp.eq.s32.totalorder %s21, 0
      %p98 = por %p96, %p97
      %p99 = scmp.ne.s32.totalorder %s87, %s88
      %p100 = scmp.eq.s32.totalorder %s22, 5
      %p101 = por %p99, %p100
      %p103 = scmp.ne.s32.totalorder %s88, %s102
      %p104 = scmp.eq.s32.totalorder %s22, 0
      %p105 = por %p103, %p104
      %s107 = sadd.s32 %s106, 1
      %p110 = scmp.eq.s32.totalorder %s16, 5
      %p111 = scmp.ne.s32.totalorder %s106, %s108
      %p112 = scmp.eq.s32.totalorder %s16, 0
      %p113 = por %p111, %p112
      %p114 = scmp.ne.s32.totalorder %s106, %s108
      %p115 = scmp.eq.s32.totalorder %s21, 5
      %p116 = por %p114, %p115
      %p117 = scmp.ne.s32.totalorder %s108, %s109
      %p118 = scmp.eq.s32.totalorder %s21, 0
      %p119 = por %p117, %p118
      %p120 = scmp.ne.s32.totalorder %s108, %s109
      %p121 = scmp.eq.s32.totalorder %s22, 5
      %p122 = por %p120, %p121
      %p124 = scmp.ne.s32.totalorder %s109, %s123
      %p125 = scmp.eq.s32.totalorder %s22, 0
      %p126 = por %p124, %p125
      %s128 = sadd.s32 %s127, 1
      %p131 = scmp.eq.s32.totalorder %s16, 5
      %p132 = scmp.ne.s32.totalorder %s127, %s129
      %p133 = scmp.eq.s32.totalorder %s16, 0
      %p134 = por %p132, %p133
      %p135 = scmp.ne.s32.totalorder %s127, %s129
      %p136 = scmp.eq.s32.totalorder %s21, 5
      %p137 = por %p135, %p136
      %p138 = scmp.ne.s32.totalorder %s129, %s130
      %p139 = scmp.eq.s32.totalorder %s21, 0
      %p140 = por %p138, %p139
      %p141 = scmp.ne.s32.totalorder %s129, %s130
      %p142 = scmp.eq.s32.totalorder %s22, 5
      %p143 = por %p141, %p142
      %p145 = scmp.ne.s32.totalorder %s130, %s144
      %p146 = scmp.eq.s32.totalorder %s22, 0
      %p147 = por %p145, %p146
      %s149 = sadd.s32 %s148, 1
      %p152 = scmp.eq.s32.totalorder %s16, 5
      %p153 = scmp.ne.s32.totalorder %s148, %s150
      %p154 = scmp.eq.s32.totalorder %s16, 0
      %p155 = por %p153, %p154
      %p156 = scmp.ne.s32.totalorder %s148, %s150
      %p157 = scmp.eq.s32.totalorder %s21, 5
      %p158 = por %p156, %p157
      %p159 = scmp.ne.s32.totalorder %s150, %s151
      %p160 = scmp.eq.s32.totalorder %s21, 0
      %p161 = por %p159, %p160
      %p162 = scmp.ne.s32.totalorder %s150, %s151
      %p163 = scmp.eq.s32.totalorder %s22, 5
      %p164 = por %p162, %p163
      %p166 = scmp.ne.s32.totalorder %s151, %s165
      %p167 = scmp.eq.s32.totalorder %s22, 0
      %p168 = por %p166, %p167
      %s170 = sadd.s32 %s169, 1
      %p173 = scmp.eq.s32.totalorder %s16, 5
      %p174 = scmp.ne.s32.totalorder %s169, %s171
      %p175 = scmp.eq.s32.totalorder %s16, 0
      %p176 = por %p174, %p175
      %p177 = scmp.ne.s32.totalorder %s169, %s171
      %p178 = scmp.eq.s32.totalorder %s21, 5
      %p179 = por %p177, %p178
      %p180 = scmp.ne.s32.totalorder %s171, %s172
      %p181 = scmp.eq.s32.totalorder %s21, 0
      %p182 = por %p180, %p181
      %p183 = scmp.ne.s32.totalorder %s171, %s172
      %p184 = scmp.eq.s32.totalorder %s22, 5
      %p185 = por %p183, %p184
      %p187 = scmp.ne.s32.totalorder %s172, %s186
      %p188 = scmp.eq.s32.totalorder %s22, 0
      %p189 = por %p187, %p188
      %s191 = sadd.s32 %s190, 1
      %p194 = scmp.eq.s32.totalorder %s16, 5
      %p195 = scmp.ne.s32.totalorder %s190, %s192
      %p196 = scmp.eq.s32.totalorder %s16, 0
      %p197 = por %p195, %p196
      %p198 = scmp.ne.s32.totalorder %s190, %s192
      %p199 = scmp.eq.s32.totalorder %s21, 5
      %p200 = por %p198, %p199
      %p201 = scmp.ne.s32.totalorder %s192, %s193
      %p202 = scmp.eq.s32.totalorder %s21, 0
      %p203 = por %p201, %p202
      %p204 = scmp.ne.s32.totalorder %s192, %s193
      %p205 = scmp.eq.s32.totalorder %s22, 5
      %p206 = por %p204, %p205
      %p208 = scmp.ne.s32.totalorder %s193, %s207
      %p209 = scmp.eq.s32.totalorder %s22, 0
      %p210 = por %p208, %p209
      %s212 = sadd.s32 %s211, 1
      %p215 = scmp.eq.s32.totalorder %s16, 5
      %p216 = scmp.ne.s32.totalorder %s211, %s213
      %p217 = scmp.eq.s32.totalorder %s16, 0
      %p218 = por %p216, %p217
      %p219 = scmp.ne.s32.totalorder %s211, %s213
      %p220 = scmp.eq.s32.totalorder %s21, 5
      %p221 = por %p219, %p220
      %p222 = scmp.ne.s32.totalorder %s213, %s214
      %p223 = scmp.eq.s32.totalorder %s21, 0
      %p224 = por %p222, %p223
      %p225 = scmp.ne.s32.totalorder %s213, %s214
      %p226 = scmp.eq.s32.totalorder %s22, 5
      %p227 = por %p225, %p226
      %p229 = scmp.ne.s32.totalorder %s214, %s228
      %p230 = scmp.eq.s32.totalorder %s22, 0
      %p231 = por %p229, %p230
      %s232 = ssub.s32 %s23, %s35
      %s233 = ssub.s32 %s24, %s31
      %s234 = sor.u32 %s232, %s233
      %p235 = scmp.eq.s32.totalorder %s234, 0
      %s237 = sadd.s32 %s236, 1
      %s238 = scalar_select %p235, %s236, %s237
      %p241 = pneg %p235
      %p242 = scmp.eq.s32.totalorder %s16, 5
      %p243 = por %p241, %p242
      %p244 = scmp.ne.s32.totalorder %s236, %s239
      %p245 = scmp.eq.s32.totalorder %s16, 0
      %p246 = por %p244, %p245
      %p247 = scmp.ne.s32.totalorder %s236, %s239
      %p248 = scmp.eq.s32.totalorder %s21, 5
      %p249 = por %p247, %p248
      %p250 = scmp.ne.s32.totalorder %s239, %s240
      %p251 = scmp.eq.s32.totalorder %s21, 0
      %p252 = por %p250, %p251
      %p253 = scmp.ne.s32.totalorder %s239, %s240
      %p254 = scmp.eq.s32.totalorder %s22, 5
      %p255 = por %p253, %p254
      %p257 = scmp.ne.s32.totalorder %s240, %s256
      %p258 = scmp.eq.s32.totalorder %s22, 0
      %p259 = por %p257, %p258
      %p260 = scmp.le.s32.totalorder 1, %s16
      %p261 = scmp.lt.s32.totalorder %s16, 7
      %p262 = pnand %p260, %p261
      %p263 = pneg %p262
      // Predicated region
      $region9: #{tpu_custom_call.1} parent=5 // pred_check
        _
      $region10: #{tpu_custom_call.1} parent=5 // pred_check_branch
        %265 = sbr.rel (%p262) target = $region12
      $region11: #{tpu_custom_call.1} parent=5 // pred_region
        %s266 = ssub.s32 %s16, 1
        // Predicated region
        $region13: #{tpu_custom_call.1} parent=11 // pred_check
          %p267 = pneg %p77
        $region14: #{tpu_custom_call.1} parent=11 // pred_check_branch
          %269 = sbr.rel (%p267) target = $region16
        $region15: #{tpu_custom_call.1} parent=11 // pred_region
          _
        $region16: #{tpu_custom_call.1} parent=11 // pred_fallthru
          _
        // Predicated region
        $region17: #{tpu_custom_call.1} parent=11 // pred_check
          %p270 = pneg %p98
        $region18: #{tpu_custom_call.1} parent=11 // pred_check_branch
          %272 = sbr.rel (%p270) target = $region20
        $region19: #{tpu_custom_call.1} parent=11 // pred_region
          _
        $region20: #{tpu_custom_call.1} parent=11 // pred_fallthru
          _
        // Predicated region
        $region21: #{tpu_custom_call.1} parent=11 // pred_check
          %p273 = pneg %p119
        $region22: #{tpu_custom_call.1} parent=11 // pred_check_branch
          %275 = sbr.rel (%p273) target = $region24
        $region23: #{tpu_custom_call.1} parent=11 // pred_region
          %s277 = ssub.s32 4096, 4096
          %278 = vsyncadd [#allocation3], %s277
          %s279 = sshll.u32 [#allocation2], 4
          %s280 = int_to_ptr.vmem [resolvable:$true] %s279
          %285 = dma.hbm_to_vmem [thread:$0]  %s3, 4096, %s280, [#allocation3], 128, 128, 8
        $region24: #{tpu_custom_call.1} parent=11 // pred_fallthru
          _
        // Predicated region
        $region25: #{tpu_custom_call.1} parent=11 // pred_check
          %p286 = pneg %p140
        $region26: #{tpu_custom_call.1} parent=11 // pred_check_branch
          %288 = sbr.rel (%p286) target = $region28
        $region27: #{tpu_custom_call.1} parent=11 // pred_region
          _
        $region28: #{tpu_custom_call.1} parent=11 // pred_fallthru
          _
        // Predicated region
        $region29: #{tpu_custom_call.1} parent=11 // pred_check
          %p289 = pneg %p161
        $region30: #{tpu_custom_call.1} parent=11 // pred_check_branch
          %291 = sbr.rel (%p289) target = $region32
        $region31: #{tpu_custom_call.1} parent=11 // pred_region
          _
        $region32: #{tpu_custom_call.1} parent=11 // pred_fallthru
          _
        // Predicated region
        $region33: #{tpu_custom_call.1} parent=11 // pred_check
          %p292 = pneg %p182
        $region34: #{tpu_custom_call.1} parent=11 // pred_check_branch
          %294 = sbr.rel (%p292) target = $region36
        $region35: #{tpu_custom_call.1} parent=11 // pred_region
          _
        $region36: #{tpu_custom_call.1} parent=11 // pred_fallthru
          _
        // Predicated region
        $region37: #{tpu_custom_call.1} parent=11 // pred_check
          %p295 = pneg %p203
        $region38: #{tpu_custom_call.1} parent=11 // pred_check_branch
          %297 = sbr.rel (%p295) target = $region40
        $region39: #{tpu_custom_call.1} parent=11 // pred_region
          _
        $region40: #{tpu_custom_call.1} parent=11 // pred_fallthru
          _
        // Predicated region
        $region41: #{tpu_custom_call.1} parent=11 // pred_check
          %p298 = pneg %p224
        $region42: #{tpu_custom_call.1} parent=11 // pred_check_branch
          %300 = sbr.rel (%p298) target = $region44
        $region43: #{tpu_custom_call.1} parent=11 // pred_region
          _
        $region44: #{tpu_custom_call.1} parent=11 // pred_fallthru
          _
      $region12: #{tpu_custom_call.1} parent=5 // pred_fallthru
        _
      %p301 = scmp.lt.s32.totalorder %s16, 6
      // Predicated region
      $region45: #{tpu_custom_call.1} parent=5 // pred_check
        %p302 = pneg %p301
      $region46: #{tpu_custom_call.1} parent=5 // pred_check_branch
        %304 = sbr.rel (%p302) target = $region48
      $region47: #{tpu_custom_call.1} parent=5 // pred_region
        // Predicated region
        $region49: #{tpu_custom_call.1} parent=47 // pred_check
          %p305 = pneg %p50
        $region50: #{tpu_custom_call.1} parent=47 // pred_check_branch
          %307 = sbr.rel (%p305) target = $region52
        $region51: #{tpu_custom_call.1} parent=47 // pred_region
          %p308 = scmp.lt.s32.totalorder %s23, 1
          %s309 = scalar_select %p308, %s23, 1
          %p310 = scmp.lt.s32.totalorder %s24, 2
          %s311 = scalar_select %p310, %s24, 2
          %s312 = smul.addr %s311, 2
          %s313 = smul.addr %s309, 6
          %s314 = sadd.s32 %s312, %s313
          %s315 = smul.addr %s314, 8
          %s316 = scalar_lea.vmem %s0, %s315
        $region52: #{tpu_custom_call.1} parent=47 // pred_fallthru
          _
      $region48: #{tpu_custom_call.1} parent=5 // pred_fallthru
        _
      %p317 = scmp.le.s32.totalorder 1, %s16
      %p318 = scmp.lt.s32.totalorder %s16, 7
      %p319 = pnand %p317, %p318
      %p320 = pneg %p319
      // Predicated region
      $region53: #{tpu_custom_call.1} parent=5 // pred_check
        _
      $region54: #{tpu_custom_call.1} parent=5 // pred_check_branch
        %322 = sbr.rel (%p319) target = $region56
      $region55: #{tpu_custom_call.1} parent=5 // pred_region
        %s323 = ssub.s32 %s16, 1
        // Predicated region
        $region57: #{tpu_custom_call.1} parent=55 // pred_check
          %p324 = pneg %p119
        $region58: #{tpu_custom_call.1} parent=55 // pred_check_branch
          %326 = sbr.rel (%p324) target = $region60
        $region59: #{tpu_custom_call.1} parent=55 // pred_region
          %327 = dma.done [#allocation3], 4096
        $region60: #{tpu_custom_call.1} parent=55 // pred_fallthru
          _
        %p328 = scmp.lt.s32.totalorder %s25, 1
        %s329 = scalar_select %p328, %s25, 1
        %p330 = scmp.lt.s32.totalorder %s26, 2
        %s331 = scalar_select %p330, %s26, 2
        %s332 = smul.addr %s331, 2
        %s333 = smul.addr %s329, 6
        %s334 = sadd.s32 %s332, %s333
        %s335 = smul.addr %s334, 8
        %s336 = scalar_lea.vmem %s0, %s335
        %p337 = pneg %p56
        %p338 = pneg %p53
        %p339 = pneg %p77
        %p340 = pneg %p74
        %p341 = pneg %p98
        %p342 = pneg %p95
        %p343 = pneg %p119
        %p344 = pneg %p116
        %p345 = pneg %p140
        %p346 = pneg %p137
        %p347 = pneg %p161
        %p348 = pneg %p158
        %p349 = pneg %p182
        %p350 = pneg %p179
        %p351 = pneg %p203
        %p352 = pneg %p200
        %p353 = pneg %p224
        %p354 = pneg %p221
        %p355 = pneg %p252
        %p356 = pneg %p249
        %p357 = scmp.lt.s32.totalorder %s25, 1
        %s358 = scalar_select %p357, %s25, 1
        %p359 = scmp.lt.s32.totalorder %s26, 2
        %s360 = scalar_select %p359, %s26, 2
        %s361 = smul.addr %s358, 3
        %s362 = sadd.s32 %s360, %s361
        %s363 = smul.addr %s362, 8
        %s364 = scalar_lea.vmem %s9, %s363
        %p365 = scmp.lt.s32.totalorder %s25, 1
        %s366 = scalar_select %p365, %s25, 1
        %p367 = scmp.lt.s32.totalorder %s26, 2
        %s368 = scalar_select %p367, %s26, 2
        %s369 = smul.addr %s368, 2
        %s370 = smul.addr %s366, 6
        %s371 = sadd.s32 %s369, %s370
        %s372 = smul.addr %s371, 8
        %s373 = scalar_lea.vmem %s0, %s372
        %p374 = scmp.lt.s32.totalorder %s25, 1
        %s375 = scalar_select %p374, %s25, 1
        %p376 = scmp.lt.s32.totalorder %s26, 2
        %s377 = scalar_select %p376, %s26, 2
        %s378 = smul.addr %s375, 3
        %s379 = sadd.s32 %s377, %s378
        %s380 = smul.addr %s379, 8
        %s381 = scalar_lea.vmem %s9, %s380
        %v383 = vld [vmem:[%s373] sm:$0xff]
        %v384 = vld [vmem:[%s373 + $0x8] sm:$0xff]
        %v385 = vadd.f32 %v383, %v384
        %386 = vadd.xlane.f32.xlu0 %v385
        %v387 = vpop.xlane.xlu0 %386
        %v388 = vrcp.pop 256.0
        %v389 = vmul.f32 %v387, %v388
        %v390 = vmul.f32 %v383, %v383
        %v391 = vmul.f32 %v384, %v384
        %v392 = vadd.f32 %v390, %v391
        %393 = vadd.xlane.f32.xlu0 %v392
        %v394 = vpop.xlane.xlu0 %393
        %v395 = vmul.f32 %v394, %v388
        %v396 = vmul.f32 %v389, %v389
        %v397 = vsub.f32 %v395, %v396
        %v398 = vmax.f32 %v397, 0.0
        %v399 = vsub.f32 %v383, %v389
        %v400 = vsub.f32 %v384, %v389
        %v401 = vadd.f32 %v398, 1e-05
        %v402 = vrsqrt.pop %v401
        %v403 = vmul.f32 %v399, %v402
        %v404 = vmul.f32 %v400, %v402
        %v405 = vld [vmem:[%s1] sm:$0x3]
        %v407 = vlaneseq
        %v408 = vshrl.u32 %v407, 7
        %v409 = vsub.s32 0, %v408
        %v410 = vrot.slane %v405, %v409
        %v411 = vlaneseq
        %v412 = vshrl.u32 %v411, 7
        %v413 = vsub.s32 1, %v412
        %v414 = vrot.slane %v405, %v413
        %v417 = vmul.f32 %v403, %v410
        %v418 = vmul.f32 %v404, %v414
        %v419 = vld [vmem:[%s2] sm:$0x3]
        %v421 = vlaneseq
        %v422 = vshrl.u32 %v421, 7
        %v423 = vsub.s32 0, %v422
        %v424 = vrot.slane %v419, %v423
        %v425 = vlaneseq
        %v426 = vshrl.u32 %v425, 7
        %v427 = vsub.s32 1, %v426
        %v428 = vrot.slane %v419, %v427
        %v431 = vadd.f32 %v417, %v424
        %v432 = vadd.f32 %v418, %v428
        %v433 = vpack.c.bf16 %v431, %v431
        %v434 = vpack.c.bf16 %v432, %v432
        %v435 = vld [vmem:[#allocation2] sm:$0xff]
        %v436 = vld [vmem:[#allocation2 + $0x8] sm:$0xff]
        %v437 = vld [vmem:[#allocation2 + $0x10] sm:$0xff]
        %v438 = vld [vmem:[#allocation2 + $0x18] sm:$0xff]
        %v439 = vld [vmem:[#allocation2 + $0x20] sm:$0xff]
        %v440 = vld [vmem:[#allocation2 + $0x28] sm:$0xff]
        %v441 = vld [vmem:[#allocation2 + $0x30] sm:$0xff]
        %v442 = vld [vmem:[#allocation2 + $0x38] sm:$0xff]
        %v443 = vld [vmem:[#allocation2 + $0x40] sm:$0xff]
        %v444 = vld [vmem:[#allocation2 + $0x48] sm:$0xff]
        %v445 = vld [vmem:[#allocation2 + $0x50] sm:$0xff]
        %v446 = vld [vmem:[#allocation2 + $0x58] sm:$0xff]
        %v447 = vld [vmem:[#allocation2 + $0x60] sm:$0xff]
        %v448 = vld [vmem:[#allocation2 + $0x68] sm:$0xff]
        %v449 = vld [vmem:[#allocation2 + $0x70] sm:$0xff]
        %v450 = vld [vmem:[#allocation2 + $0x78] sm:$0xff]
        %v451 = vld [vmem:[#allocation2 + $0x80] sm:$0xff]
        %v452 = vld [vmem:[#allocation2 + $0x88] sm:$0xff]
        %v453 = vld [vmem:[#allocation2 + $0x90] sm:$0xff]
        %v454 = vld [vmem:[#allocation2 + $0x98] sm:$0xff]
        %v455 = vld [vmem:[#allocation2 + $0xa0] sm:$0xff]
        %v456 = vld [vmem:[#allocation2 + $0xa8] sm:$0xff]
        %v457 = vld [vmem:[#allocation2 + $0xb0] sm:$0xff]
        %v458 = vld [vmem:[#allocation2 + $0xb8] sm:$0xff]
        %v459 = vld [vmem:[#allocation2 + $0xc0] sm:$0xff]
        %v460 = vld [vmem:[#allocation2 + $0xc8] sm:$0xff]
        %v461 = vld [vmem:[#allocation2 + $0xd0] sm:$0xff]
        %v462 = vld [vmem:[#allocation2 + $0xd8] sm:$0xff]
        %v463 = vld [vmem:[#allocation2 + $0xe0] sm:$0xff]
        %v464 = vld [vmem:[#allocation2 + $0xe8] sm:$0xff]
        %v465 = vld [vmem:[#allocation2 + $0xf0] sm:$0xff]
        %v466 = vld [vmem:[#allocation2 + $0xf8] sm:$0xff]
        %v467 = vld [vmem:[%s4] sm:$0x3]
        %v468 = vunpack.c.l.bf16 %v467
        %v470 = vlaneseq
        %v471 = vshrl.u32 %v470, 7
        %v472 = vsub.s32 0, %v471
        %v473 = vrot.slane %v468, %v472
        %v474 = vlaneseq
        %v475 = vshrl.u32 %v474, 7
        %v476 = vsub.s32 2, %v475
        %v477 = vrot.slane %v468, %v476
        %v480 = vlaneseq
        %v481 = vshrl.u32 %v480, 7
        %v482 = vsub.s32 0, %v481
        %v483 = vrot.slane %v473, %v482
        %v484 = vlaneseq
        %v485 = vshrl.u32 %v484, 7
        %v486 = vsub.s32 0, %v485
        %v487 = vrot.slane %v477, %v486
        %v520 = vunpack.c.l.b16 %v435
        %v521 = vunpack.c.h.b16 %v435
        %v522 = vunpack.c.l.b16 %v436
        %v523 = vunpack.c.h.b16 %v436
        %v524 = vunpack.c.l.b16 %v437
        %v525 = vunpack.c.h.b16 %v437
        %v526 = vunpack.c.l.b16 %v438
        %v527 = vunpack.c.h.b16 %v438
        %v528 = vunpack.c.l.b16 %v439
        %v529 = vunpack.c.h.b16 %v439
        %v530 = vunpack.c.l.b16 %v440
        %v531 = vunpack.c.h.b16 %v440
        %v532 = vunpack.c.l.b16 %v441
        %v533 = vunpack.c.h.b16 %v441
        %v534 = vunpack.c.l.b16 %v442
        %v535 = vunpack.c.h.b16 %v442
        %v536 = vunpack.c.l.b16 %v443
        %v537 = vunpack.c.h.b16 %v443
        %v538 = vunpack.c.l.b16 %v444
        %v539 = vunpack.c.h.b16 %v444
        %v540 = vunpack.c.l.b16 %v445
        %v541 = vunpack.c.h.b16 %v445
        %v542 = vunpack.c.l.b16 %v446
        %v543 = vunpack.c.h.b16 %v446
        %v544 = vunpack.c.l.b16 %v447
        %v545 = vunpack.c.h.b16 %v447
        %v546 = vunpack.c.l.b16 %v448
        %v547 = vunpack.c.h.b16 %v448
        %v548 = vunpack.c.l.b16 %v449
        %v549 = vunpack.c.h.b16 %v449
        %v550 = vunpack.c.l.b16 %v450
        %v551 = vunpack.c.h.b16 %v450
        %v552 = vunpack.c.l.b16 %v451
        %v553 = vunpack.c.h.b16 %v451
        %v554 = vunpack.c.l.b16 %v452
        %v555 = vunpack.c.h.b16 %v452
        %v556 = vunpack.c.l.b16 %v453
        %v557 = vunpack.c.h.b16 %v453
        %v558 = vunpack.c.l.b16 %v454
        %v559 = vunpack.c.h.b16 %v454
        %v560 = vunpack.c.l.b16 %v455
        %v561 = vunpack.c.h.b16 %v455
        %v562 = vunpack.c.l.b16 %v456
        %v563 = vunpack.c.h.b16 %v456
        %v564 = vunpack.c.l.b16 %v457
        %v565 = vunpack.c.h.b16 %v457
        %v566 = vunpack.c.l.b16 %v458
        %v567 = vunpack.c.h.b16 %v458
        %v568 = vunpack.c.l.b16 %v459
        %v569 = vunpack.c.h.b16 %v459
        %v570 = vunpack.c.l.b16 %v460
        %v571 = vunpack.c.h.b16 %v460
        %v572 = vunpack.c.l.b16 %v461
        %v573 = vunpack.c.h.b16 %v461
        %v574 = vunpack.c.l.b16 %v462
        %v575 = vunpack.c.h.b16 %v462
        %v576 = vunpack.c.l.b16 %v463
        %v577 = vunpack.c.h.b16 %v463
        %v578 = vunpack.c.l.b16 %v464
        %v579 = vunpack.c.h.b16 %v464
        %v580 = vunpack.c.l.b16 %v465
        %v581 = vunpack.c.h.b16 %v465
        %v582 = vunpack.c.l.b16 %v466
        %v583 = vunpack.c.h.b16 %v466
        %v584 = vpack.c.b16 %v522, %v520
        %v585 = vpack.c.b16 %v523, %v521
        %v586 = vpack.c.b16 %v526, %v524
        %v587 = vpack.c.b16 %v527, %v525
        %v588 = vpack.c.b16 %v530, %v528
        %v589 = vpack.c.b16 %v531, %v529
        %v590 = vpack.c.b16 %v534, %v532
        %v591 = vpack.c.b16 %v535, %v533
        %v592 = vpack.c.b16 %v538, %v536
        %v593 = vpack.c.b16 %v539, %v537
        %v594 = vpack.c.b16 %v542, %v540
        %v595 = vpack.c.b16 %v543, %v541
        %v596 = vpack.c.b16 %v546, %v544
        %v597 = vpack.c.b16 %v547, %v545
        %v598 = vpack.c.b16 %v550, %v548
        %v599 = vpack.c.b16 %v551, %v549
        %v600 = vpack.c.b16 %v554, %v552
        %v601 = vpack.c.b16 %v555, %v553
        %v602 = vpack.c.b16 %v558, %v556
        %v603 = vpack.c.b16 %v559, %v557
        %v604 = vpack.c.b16 %v562, %v560
        %v605 = vpack.c.b16 %v563, %v561
        %v606 = vpack.c.b16 %v566, %v564
        %v607 = vpack.c.b16 %v567, %v565
        %v608 = vpack.c.b16 %v570, %v568
        %v609 = vpack.c.b16 %v571, %v569
        %v610 = vpack.c.b16 %v574, %v572
        %v611 = vpack.c.b16 %v575, %v573
        %v612 = vpack.c.b16 %v578, %v576
        %v613 = vpack.c.b16 %v579, %v577
        %v614 = vpack.c.b16 %v582, %v580
        %v615 = vpack.c.b16 %v583, %v581
        %648 = vmatprep.subr.bf16.mxu0 %v585
        %649 = vmatpush1.bf16.msra.mxu0 %v584
        %650 = vmatprep.subr.bf16.mxu0 %v587
        %651 = vmatpush1.bf16.msra.mxu0 %v586
        %652 = vmatprep.subr.bf16.mxu0 %v589
        %653 = vmatpush1.bf16.msra.mxu0 %v588
        %654 = vmatprep.subr.bf16.mxu0 %v591
        %655 = vmatpush1.bf16.msra.mxu0 %v590
        %656 = vmatprep.subr.bf16.mxu0 %v593
        %657 = vmatpush1.bf16.msra.mxu0 %v592
        %658 = vmatprep.subr.bf16.mxu0 %v595
        %659 = vmatpush1.bf16.msra.mxu0 %v594
        %660 = vmatprep.subr.bf16.mxu0 %v597
        %661 = vmatpush1.bf16.msra.mxu0 %v596
        %662 = vmatprep.subr.bf16.mxu0 %v599
        %663 = vmatpush1.bf16.msra.mxu0 %v598
        %664 = vmatprep.subr.bf16.mxu0 %v601
        %665 = vmatpush1.bf16.msra.mxu0 %v600
        %666 = vmatprep.subr.bf16.mxu0 %v603
        %667 = vmatpush1.bf16.msra.mxu0 %v602
        %668 = vmatprep.subr.bf16.mxu0 %v605
        %669 = vmatpush1.bf16.msra.mxu0 %v604
        %670 = vmatprep.subr.bf16.mxu0 %v607
        %671 = vmatpush1.bf16.msra.mxu0 %v606
        %672 = vmatprep.subr.bf16.mxu0 %v609
        %673 = vmatpush1.bf16.msra.mxu0 %v608
        %674 = vmatprep.subr.bf16.mxu0 %v611
        %675 = vmatpush1.bf16.msra.mxu0 %v610
        %676 = vmatprep.subr.bf16.mxu0 %v613
        %677 = vmatpush1.bf16.msra.mxu0 %v612
        %678 = vmatprep.subr.bf16.mxu0 %v615
        %679 = vmatpush1.bf16.msra.mxu0 %v614
        %680 = vmatprep.mubr.bf16.mxu0 %v434
        %681 = vmatmul.mubr.bf16.gmra.mrb[0].mxu0 %v433
        %v682 = vpop.f32.mrb[0].mxu0
        %v683 = vadd.f32 %v483, %v682
        %v684 = vpop.f32.mrb[0].mxu0
        %v685 = vadd.f32 %v487, %v684
        %v686 = vpop.f32.mrb[0].mxu0
        %v687 = vpop.f32.mrb[0].mxu0
        %688 = vdwg.mxu0
        %v689 = vmul.f32 %v683, 0.5
        %v690 = vmul.f32 %v685, 0.5
        %v691 = vmul.f32 %v683, 0.70710677
        %v692 = vmul.f32 %v685, 0.70710677
        %vm693 = vcmp.lt.f32.partialorder %v691, 0.0
        %vm694 = vcmp.lt.f32.partialorder %v692, 0.0
        %v695 = vsel %vm693, -1.0, 1.0
        %v696 = vsel %vm694, -1.0, 1.0
        %v697 = vand.u32 2147483647, %v691
        %v698 = vand.u32 2147483647, %v692
        %v699 = vmul.f32 %v697, 0.3275911
        %v700 = vmul.f32 %v698, 0.3275911
        %v701 = vadd.f32 %v699, 1.0
        %v702 = vadd.f32 %v700, 1.0
        %v703 = vrcp.pop %v701
        %v704 = vmul.f32 1.0, %v703
        %v705 = vrcp.pop %v702
        %v706 = vmul.f32 1.0, %v705
        %v707 = vmul.f32 %v704, 1.0614054
        %v708 = vmul.f32 %v706, 1.0614054
        %v709 = vadd.f32 %v707, -1.4531521
        %v710 = vadd.f32 %v708, -1.4531521
        %v711 = vmul.f32 %v709, %v704
        %v712 = vmul.f32 %v710, %v706
        %v713 = vadd.f32 %v711, 1.4214138
        %v714 = vadd.f32 %v712, 1.4214138
        %v715 = vmul.f32 %v713, %v704
        %v716 = vmul.f32 %v714, %v706
        %v717 = vadd.f32 %v715, -0.28449672
        %v718 = vadd.f32 %v716, -0.28449672
        %v719 = vmul.f32 %v717, %v704
        %v720 = vmul.f32 %v718, %v706
        %v721 = vadd.f32 %v719, 0.2548296
        %v722 = vadd.f32 %v720, 0.2548296
        %v723 = vmul.f32 %v721, %v704
        %v724 = vmul.f32 %v722, %v706
        %v725 = vsub.f32 0.0, %v697
        %v726 = vsub.f32 0.0, %v698
        %v727 = vmul.f32 %v725, %v697
        %v728 = vmul.f32 %v726, %v698
        %v729 = vmul.f32 %v727, 1.442695
        %v730 = vpow.pop %v729
        %v731 = vmul.f32 %v728, 1.442695
        %v732 = vpow.pop %v731
        %v733 = vmul.f32 %v723, %v730
        %v734 = vmul.f32 %v724, %v732
        %v735 = vsub.f32 1.0, %v733
        %v736 = vsub.f32 1.0, %v734
        %v737 = vmul.f32 %v695, %v735
        %v738 = vmul.f32 %v696, %v736
        %v739 = vadd.f32 %v737, 1.0
        %v740 = vadd.f32 %v738, 1.0
        %v741 = vmul.f32 %v689, %v739
        %v742 = vmul.f32 %v690, %v740
        %v743 = vpack.c.bf16 %v741, %v741
        %v744 = vpack.c.bf16 %v742, %v742
        %v745 = vld [vmem:[%s5] sm:$0xf]
        %v746 = vld [vmem:[%s5 + $0x4] sm:$0xf]
        %v747 = vld [vmem:[%s5 + $0x8] sm:$0xf]
        %v748 = vld [vmem:[%s5 + $0xc] sm:$0xf]
        %v749 = vld [vmem:[%s5 + $0x10] sm:$0xf]
        %v750 = vld [vmem:[%s5 + $0x14] sm:$0xf]
        %v751 = vld [vmem:[%s5 + $0x18] sm:$0xf]
        %v752 = vld [vmem:[%s5 + $0x1c] sm:$0xf]
        %v753 = vld [vmem:[%s5 + $0x20] sm:$0xf]
        %v754 = vld [vmem:[%s5 + $0x24] sm:$0xf]
        %v755 = vld [vmem:[%s5 + $0x28] sm:$0xf]
        %v756 = vld [vmem:[%s5 + $0x2c] sm:$0xf]
        %v757 = vld [vmem:[%s5 + $0x30] sm:$0xf]
        %v758 = vld [vmem:[%s5 + $0x34] sm:$0xf]
        %v759 = vld [vmem:[%s5 + $0x38] sm:$0xf]
        %v760 = vld [vmem:[%s5 + $0x3c] sm:$0xf]
        %v761 = vld [vmem:[%s5 + $0x40] sm:$0xf]
        %v762 = vld [vmem:[%s5 + $0x44] sm:$0xf]
        %v763 = vld [vmem:[%s5 + $0x48] sm:$0xf]
        %v764 = vld [vmem:[%s5 + $0x4c] sm:$0xf]
        %v765 = vld [vmem:[%s5 + $0x50] sm:$0xf]
        %v766 = vld [vmem:[%s5 + $0x54] sm:$0xf]
        %v767 = vld [vmem:[%s5 + $0x58] sm:$0xf]
        %v768 = vld [vmem:[%s5 + $0x5c] sm:$0xf]
        %v769 = vld [vmem:[%s5 + $0x60] sm:$0xf]
        %v770 = vld [vmem:[%s5 + $0x64] sm:$0xf]
        %v771 = vld [vmem:[%s5 + $0x68] sm:$0xf]
        %v772 = vld [vmem:[%s5 + $0x6c] sm:$0xf]
        %v773 = vld [vmem:[%s5 + $0x70] sm:$0xf]
        %v774 = vld [vmem:[%s5 + $0x74] sm:$0xf]
        %v775 = vld [vmem:[%s5 + $0x78] sm:$0xf]
        %v776 = vld [vmem:[%s5 + $0x7c] sm:$0xf]
        %v777 = vld [vmem:[%s6] sm:$0x1]
        %v778 = vunpack.c.l.bf16 %v777
        %v779 = vlaneseq
        %v780 = vshrl.u32 %v779, 7
        %v781 = vsub.s32 0, %v780
        %v782 = vrot.slane %v778, %v781
        %v815 = vunpack.c.l.b16 %v745
        %v816 = vunpack.c.l.b16 %v746
        %v817 = vunpack.c.l.b16 %v747
        %v818 = vunpack.c.l.b16 %v748
        %v819 = vunpack.c.l.b16 %v749
        %v820 = vunpack.c.l.b16 %v750
        %v821 = vunpack.c.l.b16 %v751
        %v822 = vunpack.c.l.b16 %v752
        %v823 = vunpack.c.l.b16 %v753
        %v824 = vunpack.c.l.b16 %v754
        %v825 = vunpack.c.l.b16 %v755
        %v826 = vunpack.c.l.b16 %v756
        %v827 = vunpack.c.l.b16 %v757
        %v828 = vunpack.c.l.b16 %v758
        %v829 = vunpack.c.l.b16 %v759
        %v830 = vunpack.c.l.b16 %v760
        %v831 = vunpack.c.l.b16 %v761
        %v832 = vunpack.c.l.b16 %v762
        %v833 = vunpack.c.l.b16 %v763
        %v834 = vunpack.c.l.b16 %v764
        %v835 = vunpack.c.l.b16 %v765
        %v836 = vunpack.c.l.b16 %v766
        %v837 = vunpack.c.l.b16 %v767
        %v838 = vunpack.c.l.b16 %v768
        %v839 = vunpack.c.l.b16 %v769
        %v840 = vunpack.c.l.b16 %v770
        %v841 = vunpack.c.l.b16 %v771
        %v842 = vunpack.c.l.b16 %v772
        %v843 = vunpack.c.l.b16 %v773
        %v844 = vunpack.c.l.b16 %v774
        %v845 = vunpack.c.l.b16 %v775
        %v846 = vunpack.c.l.b16 %v776
        %v847 = vpack.c.b16 %v816, %v815
        %v848 = vpack.c.b16 %v818, %v817
        %v849 = vpack.c.b16 %v820, %v819
        %v850 = vpack.c.b16 %v822, %v821
        %v851 = vpack.c.b16 %v824, %v823
        %v852 = vpack.c.b16 %v826, %v825
        %v853 = vpack.c.b16 %v828, %v827
        %v854 = vpack.c.b16 %v830, %v829
        %v855 = vpack.c.b16 %v832, %v831
        %v856 = vpack.c.b16 %v834, %v833
        %v857 = vpack.c.b16 %v836, %v835
        %v858 = vpack.c.b16 %v838, %v837
        %v859 = vpack.c.b16 %v840, %v839
        %v860 = vpack.c.b16 %v842, %v841
        %v861 = vpack.c.b16 %v844, %v843
        %v862 = vpack.c.b16 %v846, %v845
        %879 = vmatprep.subr.bf16.mxu0 0
        %880 = vmatpush1.bf16.msra.mxu0 %v847
        %881 = vmatprep.subr.bf16.mxu0 0
        %882 = vmatpush1.bf16.msra.mxu0 %v848
        %883 = vmatprep.subr.bf16.mxu0 0
        %884 = vmatpush1.bf16.msra.mxu0 %v849
        %885 = vmatprep.subr.bf16.mxu0 0
        %886 = vmatpush1.bf16.msra.mxu0 %v850
        %887 = vmatprep.subr.bf16.mxu0 0
        %888 = vmatpush1.bf16.msra.mxu0 %v851
        %889 = vmatprep.subr.bf16.mxu0 0
        %890 = vmatpush1.bf16.msra.mxu0 %v852
        %891 = vmatprep.subr.bf16.mxu0 0
        %892 = vmatpush1.bf16.msra.mxu0 %v853
        %893 = vmatprep.subr.bf16.mxu0 0
        %894 = vmatpush1.bf16.msra.mxu0 %v854
        %895 = vmatprep.subr.bf16.mxu0 0
        %896 = vmatpush1.bf16.msra.mxu0 %v855
        %897 = vmatprep.subr.bf16.mxu0 0
        %898 = vmatpush1.bf16.msra.mxu0 %v856
        %899 = vmatprep.subr.bf16.mxu0 0
        %900 = vmatpush1.bf16.msra.mxu0 %v857
        %901 = vmatprep.subr.bf16.mxu0 0
        %902 = vmatpush1.bf16.msra.mxu0 %v858
        %903 = vmatprep.subr.bf16.mxu0 0
        %904 = vmatpush1.bf16.msra.mxu0 %v859
        %905 = vmatprep.subr.bf16.mxu0 0
        %906 = vmatpush1.bf16.msra.mxu0 %v860
        %907 = vmatprep.subr.bf16.mxu0 0
        %908 = vmatpush1.bf16.msra.mxu0 %v861
        %909 = vmatprep.subr.bf16.mxu0 0
        %910 = vmatpush1.bf16.msra.mxu0 %v862
        %911 = vmatprep.mubr.bf16.mxu0 %v744
        %912 = vmatmul.mubr.bf16.gmra.mrb[0].mxu0 %v743
        %v913 = vpop.f32.mrb[0].mxu0
        %v914 = vadd.f32 %v782, %v913
        %v915 = vpop.f32.mrb[0].mxu0
        %v916 = vpop.f32.mrb[0].mxu0
        %v917 = vpop.f32.mrb[0].mxu0
        %918 = vdwg.mxu0
        %919 = vadd.xlane.f32.xlu0 %v914
        %v920 = vpop.xlane.xlu0 %919
        %v921 = vrcp.pop 128.0
        %v922 = vmul.f32 %v920, %v921
        %v923 = vmul.f32 %v914, %v914
        %924 = vadd.xlane.f32.xlu0 %v923
        %v925 = vpop.xlane.xlu0 %924
        %v926 = vmul.f32 %v925, %v921
        %v927 = vmul.f32 %v922, %v922
        %v928 = vsub.f32 %v926, %v927
        %v929 = vmax.f32 %v928, 0.0
        %v930 = vsub.f32 %v914, %v922
        %v931 = vadd.f32 %v929, 1e-05
        %v932 = vrsqrt.pop %v931
        %v933 = vmul.f32 %v930, %v932
        %v934 = vld [vmem:[%s7] sm:$0x1]
        %v936 = vlaneseq
        %v937 = vshrl.u32 %v936, 7
        %v938 = vsub.s32 0, %v937
        %v939 = vrot.slane %v934, %v938
        %v941 = vmul.f32 %v933, %v939
        %v942 = vld [vmem:[%s8] sm:$0x1]
        %v944 = vlaneseq
        %v945 = vshrl.u32 %v944, 7
        %v946 = vsub.s32 0, %v945
        %v947 = vrot.slane %v942, %v946
        %v949 = vadd.f32 %v941, %v947
        %950 = vst [vmem:[%s381] sm:$0xff] %v949
        %p951 = scmp.lt.s32.totalorder %s25, 1
        %s952 = scalar_select %p951, %s25, 1
        %p953 = scmp.lt.s32.totalorder %s26, 2
        %s954 = scalar_select %p953, %s26, 2
        %s955 = smul.addr %s952, 3
        %s956 = sadd.s32 %s954, %s955
        %s957 = smul.addr %s956, 8
        %s958 = scalar_lea.vmem %s9, %s957
        // Predicated region
        $region61: #{tpu_custom_call.1} parent=55 // pred_check
          %p959 = pneg %p249
        $region62: #{tpu_custom_call.1} parent=55 // pred_check_branch
          %961 = sbr.rel (%p959) target = $region64
        $region63: #{tpu_custom_call.1} parent=55 // pred_region
          _
        $region64: #{tpu_custom_call.1} parent=55 // pred_fallthru
          _
      $region56: #{tpu_custom_call.1} parent=5 // pred_fallthru
        _
      %p962 = scmp.le.s32.totalorder 2, %s16
      // Predicated region
      $region65: #{tpu_custom_call.1} parent=5 // pred_check
        %p963 = pneg %p962
      $region66: #{tpu_custom_call.1} parent=5 // pred_check_branch
        %965 = sbr.rel (%p963) target = $region68
      $region67: #{tpu_custom_call.1} parent=5 // pred_region
        %s966 = ssub.s32 %s16, 2
        // Predicated region
        $region69: #{tpu_custom_call.1} parent=67 // pred_check
          %p967 = pneg %p255
        $region70: #{tpu_custom_call.1} parent=67 // pred_check_branch
          %969 = sbr.rel (%p967) target = $region72
        $region71: #{tpu_custom_call.1} parent=67 // pred_region
          %p970 = scmp.lt.s32.totalorder %s27, 1
          %s971 = scalar_select %p970, %s27, 1
          %p972 = scmp.lt.s32.totalorder %s28, 2
          %s973 = scalar_select %p972, %s28, 2
          %s974 = smul.addr %s971, 3
          %s975 = sadd.s32 %s973, %s974
          %s976 = smul.addr %s975, 8
          %s977 = scalar_lea.vmem %s9, %s976
        $region72: #{tpu_custom_call.1} parent=67 // pred_fallthru
          _
      $region68: #{tpu_custom_call.1} parent=5 // pred_fallthru
        _
    $region6: #{tpu_custom_call.1} parent=1 // loop_footer
      %s20 = sadd.s32 1, %s16
    $region7: #{tpu_custom_call.1} parent=1 // loop_footer_branch
      %15 = sbr.rel target = $region3
    $region8: #{tpu_custom_call.1} parent=1 // loop_exit
      _
    %978 = vsyncpa [#allocation3], 1
    %s979 = scalar_lea.sflag [#allocation3], 1
    %980 = vsyncpa %s979, 1

</llo_original>
